<compile_context>
chip_gen: v7x
topology: tpu7x:2x2x1
jax: 0.10.0
libtpu: 0.0.40
codegen_flags: <defaults>
</compile_context>

<pallas_src>
import numpy as np
import jax
import jax.numpy as jnp
from jax.experimental import pallas as pl
from jax.experimental.pallas import tpu as pltpu

LANE = 128
_VMEM_LIMIT = 32 * 1024 * 1024  # safe scoped-VMEM limit on v5e/v6e/v7x


# ------------------------------ tiling helpers --------------------------------

def _round_up(x, m):
    return ((x + m - 1) // m) * m


def _tile_items(n_items, target_items, min_steps):
    """Items per block and padded item count; guarantees >= min_steps steps."""
    tb = max(1, min(target_items, pl.cdiv(n_items, min_steps)))
    steps = max(min_steps, pl.cdiv(n_items, tb))
    return tb, tb * steps


def _tile_rows8(n_rows, target_rows, min_steps):
    """Row tile (multiple of 8) and padded row count; >= min_steps steps."""
    tm = max(8, min(target_rows, pl.cdiv(n_rows, min_steps)))
    tm = _round_up(tm, 8)
    steps = max(min_steps, pl.cdiv(n_rows, tm))
    return tm, tm * steps


# ------------------------------ Pallas kernels --------------------------------

def _rowconv_kernel(x_ref, t_ref, b_ref, o_ref, acc_ref):
    """Row convolution + bias + ReLU.

    out[i, ow*OC+oc] = relu(b[oc] + sum_kh x[i+kh, :] @ T[kh])  (i = img*rows+oh)

    x_ref  : (R, WIN*Cin)        bf16   R = imgs_per_block * padded_img_rows
    t_ref  : (KH, WIN*Cin, OW*OC) bf16  block-Toeplitz row-conv weights
    b_ref  : (1, OW*OC)          f32
    o_ref  : (R, OW*OC)          bf16
    acc_ref: (R, OW*OC)          f32 VMEM scratch accumulator
    """
    x = x_ref[...]
    r = x.shape[0]
    kh_total = t_ref.shape[0]
    acc_ref[...] = jnp.dot(x, t_ref[0], preferred_element_type=jnp.float32)
    for kh in range(1, kh_total):                       # static unroll (KH=5)
        z = jnp.dot(x, t_ref[kh], preferred_element_type=jnp.float32)
        # acc[i] += z[i + kh]; valid output rows never wrap (oh + kh < img_rows).
        acc_ref[...] += pltpu.roll(z, r - kh, axis=0)
    o_ref[...] = jnp.maximum(acc_ref[...] + b_ref[...], 0.0).astype(o_ref.dtype)


def _fc_stack_kernel(x_ref, w1_ref, b1_ref, w2_ref, b2_ref, w3_ref, b3_ref,
                     o_ref):
    """Fused fc1+ReLU -> fc2+ReLU -> fc3, all weights resident in VMEM."""
    z = jnp.dot(x_ref[...], w1_ref[...], preferred_element_type=jnp.float32)
    z = jnp.maximum(z + b1_ref[...], 0.0).astype(jnp.bfloat16)
    z = jnp.dot(z, w2_ref[...], preferred_element_type=jnp.float32)
    z = jnp.maximum(z + b2_ref[...], 0.0).astype(jnp.bfloat16)
    z = jnp.dot(z, w3_ref[...], preferred_element_type=jnp.float32)
    o_ref[...] = (z + b3_ref[...]).astype(o_ref.dtype)


# ------------------------------ kernel wrappers --------------------------------

def rowconv_relu(x_rows, t, b, *, img_rows, target_imgs, min_steps=4):
    """x_rows: (n_imgs*img_rows, WIN*Cin) bf16 -> (same rows, OW*OC) bf16."""
    n_rows, k = x_rows.shape
    n_imgs = n_rows // img_rows
    kh, _, n_out = t.shape
    tb, n_imgs_pad = _tile_items(n_imgs, target_imgs, min_steps)
    rows_blk = tb * img_rows
    rows_pad = n_imgs_pad * img_rows
    if rows_pad != n_rows:
        x_rows = jnp.pad(x_rows, ((0, rows_pad - n_rows), (0, 0)))

    flops = 2 * kh * rows_pad * k * n_out
    bytes_accessed = 2 * (rows_pad * k + rows_pad * n_out + kh * k * n_out)

    out = pl.pallas_call(
        _rowconv_kernel,
        out_shape=jax.ShapeDtypeStruct((rows_pad, n_out), jnp.bfloat16),
        grid=(rows_pad // rows_blk,),
        in_specs=[pl.BlockSpec((rows_blk, k), lambda i: (i, 0)),
                  pl.BlockSpec((kh, k, n_out), lambda i: (0, 0, 0)),
                  pl.BlockSpec((1, n_out), lambda i: (0, 0))],
        out_specs=pl.BlockSpec((rows_blk, n_out), lambda i: (i, 0)),
        scratch_shapes=[pltpu.VMEM((rows_blk, n_out), jnp.float32)],
        compiler_params=pltpu.CompilerParams(
            dimension_semantics=("parallel",),
            vmem_limit_bytes=_VMEM_LIMIT),
        cost_estimate=pl.CostEstimate(flops=flops, transcendentals=0,
                                      bytes_accessed=bytes_accessed),
    )(x_rows, t, b)
    return out[:n_rows]


def fc_stack(x, w1, b1, w2, b2, w3, b3, *, target_rows=256, min_steps=2):
    """x: (B, 400) bf16 -> (B, 128) f32 logits (first 10 lanes valid)."""
    n, k = x.shape
    n1, n2, n3 = w1.shape[1], w2.shape[1], w3.shape[1]
    tm, n_pad = _tile_rows8(n, target_rows, min_steps)
    if n_pad != n:
        x = jnp.pad(x, ((0, n_pad - n), (0, 0)))
    out = pl.pallas_call(
        _fc_stack_kernel,
        out_shape=jax.ShapeDtypeStruct((n_pad, n3), jnp.float32),
        grid=(n_pad // tm,),
        in_specs=[pl.BlockSpec((tm, k), lambda i: (i, 0)),
                  pl.BlockSpec((k, n1), lambda i: (0, 0)),
                  pl.BlockSpec((1, n1), lambda i: (0, 0)),
                  pl.BlockSpec((n1, n2), lambda i: (0, 0)),
                  pl.BlockSpec((1, n2), lambda i: (0, 0)),
                  pl.BlockSpec((n2, n3), lambda i: (0, 0)),
                  pl.BlockSpec((1, n3), lambda i: (0, 0))],
        out_specs=pl.BlockSpec((tm, n3), lambda i: (i, 0)),
        compiler_params=pltpu.CompilerParams(
            dimension_semantics=("parallel",),
            vmem_limit_bytes=_VMEM_LIMIT),
    )(x, w1, b1, w2, b2, w3, b3)
    return out[:n]


# --------------------------- parameters / layout prep --------------------------

def init_params(key):
    ks = jax.random.split(key, 5)
    # Conv: xavier-normal, zero bias (as in initialize_weights()).
    std1 = (2.0 / (3 * 5 * 5 + 6 * 5 * 5)) ** 0.5
    std2 = (2.0 / (6 * 5 * 5 + 16 * 5 * 5)) ** 0.5
    return {
        "conv1_w": std1 * jax.random.normal(ks[0], (6, 3, 5, 5), jnp.float32),
        "conv1_b": jnp.zeros((6,), jnp.float32),
        "conv2_w": std2 * jax.random.normal(ks[1], (16, 6, 5, 5), jnp.float32),
        "conv2_b": jnp.zeros((16,), jnp.float32),
        # Linear: normal(0, 0.01), zero bias.  PyTorch layout (out, in).
        "fc1_w": 0.01 * jax.random.normal(ks[2], (120, 400), jnp.float32),
        "fc1_b": jnp.zeros((120,), jnp.float32),
        "fc2_w": 0.01 * jax.random.normal(ks[3], (84, 120), jnp.float32),
        "fc2_b": jnp.zeros((84,), jnp.float32),
        "fc3_w": 0.01 * jax.random.normal(ks[4], (10, 84), jnp.float32),
        "fc3_b": jnp.zeros((10,), jnp.float32),
    }


def _shift_indicator(win, ow, kw):
    """m[w_in, ow, kw] = 1 iff w_in == ow + kw  (numpy constant)."""
    m = np.zeros((win, ow, kw), np.float32)
    for o in range(ow):
        for k in range(kw):
            m[o + k, o, k] = 1.0
    return m


def _row_toeplitz(w, win):
    """Conv weight (OC, Cin, KH, KW) -> (KH, win*Cin, OW*OC) bf16 row-conv."""
    oc, cin, kh, kw = w.shape
    ow = win - kw + 1
    m = _shift_indicator(win, ow, kw)
    t = jnp.einsum("WOK,UCHK->HWCOU", m, w)          # (KH, win, Cin, OW, OC)
    return t.reshape(kh, win * cin, ow * oc).astype(jnp.bfloat16)


def _pad_to(a, shape):
    return jnp.pad(a, [(0, t - s) for s, t in zip(a.shape, shape)])


def prepare_params(p):
    """One-time layout prep: conv -> block-Toeplitz row-conv weights, fc1
    columns permuted for the NHWC flatten, fc weights lane-padded, bf16."""
    # fc1: torch flattens NCHW as (c, h, w); our flatten is (h, w, c).
    f1 = p["fc1_w"].reshape(120, 16, 25).transpose(0, 2, 1).reshape(120, 400)
    return {
        "t1": _row_toeplitz(p["conv1_w"], 32),                 # (5, 96, 168)
        "b1": jnp.tile(p["conv1_b"], 28).reshape(1, 168),
        "t2": _row_toeplitz(p["conv2_w"], 14),                 # (5, 84, 160)
        "b2": jnp.tile(p["conv2_b"], 10).reshape(1, 160),
        "f1w": _pad_to(f1.T, (400, LANE)).astype(jnp.bfloat16),
        "f1b": _pad_to(p["fc1_b"].reshape(1, 120), (1, LANE)),
        "f2w": _pad_to(p["fc2_w"].T, (LANE, LANE)).astype(jnp.bfloat16),
        "f2b": _pad_to(p["fc2_b"].reshape(1, 84), (1, LANE)),
        "f3w": _pad_to(p["fc3_w"].T, (LANE, LANE)).astype(jnp.bfloat16),
        "f3b": _pad_to(p["fc3_b"].reshape(1, 10), (1, LANE)),
    }


# ------------------------------ forward pass ----------------------------------

def net_forward(kp, x):
    # x: (B, 3, 32, 32) NCHW float32 (PyTorch convention at the interface).
    B = x.shape[0]
    x = x.transpose(0, 2, 3, 1).astype(jnp.bfloat16)           # (B,32,32,3) NHWC

    # conv1 (3->6, k=5) + ReLU as a row-conv matmul; lanes = w*3 + c.
    x1 = x.reshape(B * 32, 96)
    o1 = rowconv_relu(x1, kp["t1"], kp["b1"], img_rows=32, target_imgs=32)
    # 2x2 max-pool + decimation (thin XLA glue on the small conv output).
    o1 = o1.reshape(B, 32, 28, 6)[:, :28]                      # (B,28,28,6)
    h1 = o1.reshape(B, 14, 2, 14, 2, 6).max(axis=(2, 4))       # (B,14,14,6)

    # conv2 (6->16, k=5) + ReLU; image rows padded 14 -> 16 (sublane multiple).
    h1 = jnp.pad(h1, ((0, 0), (0, 2), (0, 0), (0, 0)))         # (B,16,14,6)
    x2 = h1.reshape(B * 16, 84)                                # lanes = w*6 + c
    o2 = rowconv_relu(x2, kp["t2"], kp["b2"], img_rows=16, target_imgs=64)
    o2 = o2.reshape(B, 16, 10, 16)[:, :10]                     # (B,10,10,16)
    h2 = o2.reshape(B, 5, 2, 5, 2, 16).max(axis=(2, 4))        # (B,5,5,16)

    # fc1+ReLU -> fc2+ReLU -> fc3 in one fused Pallas kernel.
    flat = h2.reshape(B, 400).astype(jnp.bfloat16)             # (h, w, c) order
    out = fc_stack(flat, kp["f1w"], kp["f1b"], kp["f2w"], kp["f2b"],
                   kp["f3w"], kp["f3b"])                       # (B, 128) f32
    return out[:, :10]                                         # (B, 10)


if __name__ == "__main__":
    key = jax.random.PRNGKey(0)
    pkey, xkey = jax.random.split(key)
    params = init_params(pkey)
    kernel_params = prepare_params(params)

    # fc1 expects 16*5*5 inputs => 32x32 spatial input; small batch = 2.
    x = jax.random.normal(xkey, (2, 3, 32, 32), jnp.float32)

    logits = jax.jit(net_forward)(kernel_params, x)
    logits = jax.block_until_ready(logits)
    assert logits.shape == (2, 10) and logits.dtype == jnp.float32
    print("KERNEL_OK")
</pallas_src>

<mosaic_0001>
module attributes {stable_mosaic.version = 11 : i64} {
  func.func @_rowconv_kernel(%arg0: i32, %arg1: memref<32x96xbf16, #tpu.memory_space<vmem>>, %arg2: memref<5x96x168xbf16, #tpu.memory_space<vmem>>, %arg3: memref<1x168xf32, #tpu.memory_space<vmem>>, %arg4: memref<32x168xbf16, #tpu.memory_space<vmem>>, %arg5: memref<32x168xf32, #tpu.memory_space<vmem>>) attributes {dimension_semantics = [#tpu.dimension_semantics<parallel>], iteration_bounds = array<i64: 4>, scalar_prefetch = 0 : i64, scratch_operands = 1 : i64, tpu.core_type = #tpu.core_type<tc>, window_params = [{transform_indices = @transform_0, window_bounds = array<i64: 32, 96>}, {pipeline_mode = #tpu.pipeline_mode<synchronous>, transform_indices = @transform_1, window_bounds = array<i64: 5, 96, 168>}, {pipeline_mode = #tpu.pipeline_mode<synchronous>, transform_indices = @transform_2, window_bounds = array<i64: 1, 168>}, {transform_indices = @transform_3, window_bounds = array<i64: 32, 168>}]} {
    %c0 = arith.constant 0 : index
    %c0_0 = arith.constant 0 : index
    %0 = vector.load %arg1[%c0, %c0_0] : memref<32x96xbf16, #tpu.memory_space<vmem>>, vector<32x96xbf16>
    %c0_1 = arith.constant 0 : index
    %c0_2 = arith.constant 0 : index
    %c0_3 = arith.constant 0 : index
    %1 = vector.load %arg2[%c0_1, %c0_2, %c0_3] : memref<5x96x168xbf16, #tpu.memory_space<vmem>>, vector<1x96x168xbf16>
    %2 = vector.shape_cast %1 : vector<1x96x168xbf16> to vector<96x168xbf16>
    %cst = arith.constant dense<0.000000e+00> : vector<32x168xf32>
    %3 = tpu.matmul %0, %2, %cst {dimension_numbers = #tpu.dot_dimension_numbers<[1], [0], [0], [1], [0, 0, 1, 1], [], []>} : vector<32x96xbf16>, vector<96x168xbf16>, vector<32x168xf32> -> vector<32x168xf32>
    %c0_4 = arith.constant 0 : index
    %c0_5 = arith.constant 0 : index
    %4 = vector.load %arg5[%c0_4, %c0_5] : memref<32x168xf32, #tpu.memory_space<vmem>>, vector<32x168xf32>
    tpu.vector_store %arg5[%c0_4, %c0_5], %3 {strides = array<i32>} : memref<32x168xf32, #tpu.memory_space<vmem>>, vector<32x168xf32>,
    %c1 = arith.constant 1 : index
    %c0_6 = arith.constant 0 : index
    %c0_7 = arith.constant 0 : index
    %5 = vector.load %arg2[%c1, %c0_6, %c0_7] : memref<5x96x168xbf16, #tpu.memory_space<vmem>>, vector<1x96x168xbf16>
    %6 = vector.shape_cast %5 : vector<1x96x168xbf16> to vector<96x168xbf16>
    %cst_8 = arith.constant dense<0.000000e+00> : vector<32x168xf32>
    %7 = tpu.matmul %0, %6, %cst_8 {dimension_numbers = #tpu.dot_dimension_numbers<[1], [0], [0], [1], [0, 0, 1, 1], [], []>} : vector<32x96xbf16>, vector<96x168xbf16>, vector<32x168xf32> -> vector<32x168xf32>
    %c0_9 = arith.constant 0 : index
    %c0_10 = arith.constant 0 : index
    %8 = vector.load %arg5[%c0_9, %c0_10] : memref<32x168xf32, #tpu.memory_space<vmem>>, vector<32x168xf32>
    %c31_i32 = arith.constant 31 : i32
    %9 = tpu.dynamic_rotate %7 by %c31_i32 dim 0 : vector<32x168xf32>, i32 -> vector<32x168xf32>
    %10 = arith.addf %8, %9 : vector<32x168xf32>
    %c0_11 = arith.constant 0 : index
    %c0_12 = arith.constant 0 : index
    %11 = vector.load %arg5[%c0_11, %c0_12] : memref<32x168xf32, #tpu.memory_space<vmem>>, vector<32x168xf32>
    tpu.vector_store %arg5[%c0_11, %c0_12], %10 {strides = array<i32>} : memref<32x168xf32, #tpu.memory_space<vmem>>, vector<32x168xf32>,
    %c2 = arith.constant 2 : index
    %c0_13 = arith.constant 0 : index
    %c0_14 = arith.constant 0 : index
    %12 = vector.load %arg2[%c2, %c0_13, %c0_14] : memref<5x96x168xbf16, #tpu.memory_space<vmem>>, vector<1x96x168xbf16>
    %13 = vector.shape_cast %12 : vector<1x96x168xbf16> to vector<96x168xbf16>
    %cst_15 = arith.constant dense<0.000000e+00> : vector<32x168xf32>
    %14 = tpu.matmul %0, %13, %cst_15 {dimension_numbers = #tpu.dot_dimension_numbers<[1], [0], [0], [1], [0, 0, 1, 1], [], []>} : vector<32x96xbf16>, vector<96x168xbf16>, vector<32x168xf32> -> vector<32x168xf32>
    %c0_16 = arith.constant 0 : index
    %c0_17 = arith.constant 0 : index
    %15 = vector.load %arg5[%c0_16, %c0_17] : memref<32x168xf32, #tpu.memory_space<vmem>>, vector<32x168xf32>
    %c30_i32 = arith.constant 30 : i32
    %16 = tpu.dynamic_rotate %14 by %c30_i32 dim 0 : vector<32x168xf32>, i32 -> vector<32x168xf32>
    %17 = arith.addf %15, %16 : vector<32x168xf32>
    %c0_18 = arith.constant 0 : index
    %c0_19 = arith.constant 0 : index
    %18 = vector.load %arg5[%c0_18, %c0_19] : memref<32x168xf32, #tpu.memory_space<vmem>>, vector<32x168xf32>
    tpu.vector_store %arg5[%c0_18, %c0_19], %17 {strides = array<i32>} : memref<32x168xf32, #tpu.memory_space<vmem>>, vector<32x168xf32>,
    %c3 = arith.constant 3 : index
    %c0_20 = arith.constant 0 : index
    %c0_21 = arith.constant 0 : index
    %19 = vector.load %arg2[%c3, %c0_20, %c0_21] : memref<5x96x168xbf16, #tpu.memory_space<vmem>>, vector<1x96x168xbf16>
    %20 = vector.shape_cast %19 : vector<1x96x168xbf16> to vector<96x168xbf16>
    %cst_22 = arith.constant dense<0.000000e+00> : vector<32x168xf32>
    %21 = tpu.matmul %0, %20, %cst_22 {dimension_numbers = #tpu.dot_dimension_numbers<[1], [0], [0], [1], [0, 0, 1, 1], [], []>} : vector<32x96xbf16>, vector<96x168xbf16>, vector<32x168xf32> -> vector<32x168xf32>
    %c0_23 = arith.constant 0 : index
    %c0_24 = arith.constant 0 : index
    %22 = vector.load %arg5[%c0_23, %c0_24] : memref<32x168xf32, #tpu.memory_space<vmem>>, vector<32x168xf32>
    %c29_i32 = arith.constant 29 : i32
    %23 = tpu.dynamic_rotate %21 by %c29_i32 dim 0 : vector<32x168xf32>, i32 -> vector<32x168xf32>
    %24 = arith.addf %22, %23 : vector<32x168xf32>
    %c0_25 = arith.constant 0 : index
    %c0_26 = arith.constant 0 : index
    %25 = vector.load %arg5[%c0_25, %c0_26] : memref<32x168xf32, #tpu.memory_space<vmem>>, vector<32x168xf32>
    tpu.vector_store %arg5[%c0_25, %c0_26], %24 {strides = array<i32>} : memref<32x168xf32, #tpu.memory_space<vmem>>, vector<32x168xf32>,
    %c4 = arith.constant 4 : index
    %c0_27 = arith.constant 0 : index
    %c0_28 = arith.constant 0 : index
    %26 = vector.load %arg2[%c4, %c0_27, %c0_28] : memref<5x96x168xbf16, #tpu.memory_space<vmem>>, vector<1x96x168xbf16>
    %27 = vector.shape_cast %26 : vector<1x96x168xbf16> to vector<96x168xbf16>
    %cst_29 = arith.constant dense<0.000000e+00> : vector<32x168xf32>
    %28 = tpu.matmul %0, %27, %cst_29 {dimension_numbers = #tpu.dot_dimension_numbers<[1], [0], [0], [1], [0, 0, 1, 1], [], []>} : vector<32x96xbf16>, vector<96x168xbf16>, vector<32x168xf32> -> vector<32x168xf32>
    %c0_30 = arith.constant 0 : index
    %c0_31 = arith.constant 0 : index
    %29 = vector.load %arg5[%c0_30, %c0_31] : memref<32x168xf32, #tpu.memory_space<vmem>>, vector<32x168xf32>
    %c28_i32 = arith.constant 28 : i32
    %30 = tpu.dynamic_rotate %28 by %c28_i32 dim 0 : vector<32x168xf32>, i32 -> vector<32x168xf32>
    %31 = arith.addf %29, %30 : vector<32x168xf32>
    %c0_32 = arith.constant 0 : index
    %c0_33 = arith.constant 0 : index
    %32 = vector.load %arg5[%c0_32, %c0_33] : memref<32x168xf32, #tpu.memory_space<vmem>>, vector<32x168xf32>
    tpu.vector_store %arg5[%c0_32, %c0_33], %31 {strides = array<i32>} : memref<32x168xf32, #tpu.memory_space<vmem>>, vector<32x168xf32>,
    %c0_34 = arith.constant 0 : index
    %c0_35 = arith.constant 0 : index
    %33 = vector.load %arg5[%c0_34, %c0_35] : memref<32x168xf32, #tpu.memory_space<vmem>>, vector<32x168xf32>
    %c0_36 = arith.constant 0 : index
    %c0_37 = arith.constant 0 : index
    %34 = vector.load %arg3[%c0_36, %c0_37] : memref<1x168xf32, #tpu.memory_space<vmem>>, vector<1x168xf32>
    %35 = vector.broadcast %34 : vector<1x168xf32> to vector<32x168xf32>
    %36 = arith.addf %33, %35 : vector<32x168xf32>
    %cst_38 = arith.constant 0.000000e+00 : f32
    %37 = vector.broadcast %cst_38 : f32 to vector<32x168xf32>
    %38 = arith.maximumf %36, %37 : vector<32x168xf32>
    %39 = arith.truncf %38 : vector<32x168xf32> to vector<32x168xbf16>
    %c0_39 = arith.constant 0 : index
    %c0_40 = arith.constant 0 : index
    %40 = vector.load %arg4[%c0_39, %c0_40] : memref<32x168xbf16, #tpu.memory_space<vmem>>, vector<32x168xbf16>
    tpu.vector_store %arg4[%c0_39, %c0_40], %39 {strides = array<i32>} : memref<32x168xbf16, #tpu.memory_space<vmem>>, vector<32x168xbf16>,
    return
  }
  func.func @transform_0(%arg0: i32) -> (i32, i32) {
    %c0_i32 = arith.constant 0 : i32
    %c0_i32_0 = arith.constant 0 : i32
    return %arg0, %c0_i32 : i32, i32
  }
  func.func @transform_1(%arg0: i32) -> (i32, i32, i32) {
    %c0_i32 = arith.constant 0 : i32
    %c0_i32_0 = arith.constant 0 : i32
    %c0_i32_1 = arith.constant 0 : i32
    %c0_i32_2 = arith.constant 0 : i32
    return %c0_i32, %c0_i32_0, %c0_i32_1 : i32, i32, i32
  }
  func.func @transform_2(%arg0: i32) -> (i32, i32) {
    %c0_i32 = arith.constant 0 : i32
    %c0_i32_0 = arith.constant 0 : i32
    %c0_i32_1 = arith.constant 0 : i32
    return %c0_i32, %c0_i32_0 : i32, i32
  }
  func.func @transform_3(%arg0: i32) -> (i32, i32) {
    %c0_i32 = arith.constant 0 : i32
    %c0_i32_0 = arith.constant 0 : i32
    return %arg0, %c0_i32 : i32, i32
  }
}

module attributes {stable_mosaic.version = 11 : i64} {
  func.func @_rowconv_kernel(%arg0: i32, %arg1: memref<16x84xbf16, #tpu.memory_space<vmem>>, %arg2: memref<5x84x160xbf16, #tpu.memory_space<vmem>>, %arg3: memref<1x160xf32, #tpu.memory_space<vmem>>, %arg4: memref<16x160xbf16, #tpu.memory_space<vmem>>, %arg5: memref<16x160xf32, #tpu.memory_space<vmem>>) attributes {dimension_semantics = [#tpu.dimension_semantics<parallel>], iteration_bounds = array<i64: 4>, scalar_prefetch = 0 : i64, scratch_operands = 1 : i64, tpu.core_type = #tpu.core_type<tc>, window_params = [{transform_indices = @transform_0, window_bounds = array<i64: 16, 84>}, {pipeline_mode = #tpu.pipeline_mode<synchronous>, transform_indices = @transform_1, window_bounds = array<i64: 5, 84, 160>}, {pipeline_mode = #tpu.pipeline_mode<synchronous>, transform_indices = @transform_2, window_bounds = array<i64: 1, 160>}, {transform_indices = @transform_3, window_bounds = array<i64: 16, 160>}]} {
    %c0 = arith.constant 0 : index
    %c0_0 = arith.constant 0 : index
    %0 = vector.load %arg1[%c0, %c0_0] : memref<16x84xbf16, #tpu.memory_space<vmem>>, vector<16x84xbf16>
    %c0_1 = arith.constant 0 : index
    %c0_2 = arith.constant 0 : index
    %c0_3 = arith.constant 0 : index
    %1 = vector.load %arg2[%c0_1, %c0_2, %c0_3] : memref<5x84x160xbf16, #tpu.memory_space<vmem>>, vector<1x84x160xbf16>
    %2 = vector.shape_cast %1 : vector<1x84x160xbf16> to vector<84x160xbf16>
    %cst = arith.constant dense<0.000000e+00> : vector<16x160xf32>
    %3 = tpu.matmul %0, %2, %cst {dimension_numbers = #tpu.dot_dimension_numbers<[1], [0], [0], [1], [0, 0, 1, 1], [], []>} : vector<16x84xbf16>, vector<84x160xbf16>, vector<16x160xf32> -> vector<16x160xf32>
    %c0_4 = arith.constant 0 : index
    %c0_5 = arith.constant 0 : index
    %4 = vector.load %arg5[%c0_4, %c0_5] : memref<16x160xf32, #tpu.memory_space<vmem>>, vector<16x160xf32>
    tpu.vector_store %arg5[%c0_4, %c0_5], %3 {strides = array<i32>} : memref<16x160xf32, #tpu.memory_space<vmem>>, vector<16x160xf32>,
    %c1 = arith.constant 1 : index
    %c0_6 = arith.constant 0 : index
    %c0_7 = arith.constant 0 : index
    %5 = vector.load %arg2[%c1, %c0_6, %c0_7] : memref<5x84x160xbf16, #tpu.memory_space<vmem>>, vector<1x84x160xbf16>
    %6 = vector.shape_cast %5 : vector<1x84x160xbf16> to vector<84x160xbf16>
    %cst_8 = arith.constant dense<0.000000e+00> : vector<16x160xf32>
    %7 = tpu.matmul %0, %6, %cst_8 {dimension_numbers = #tpu.dot_dimension_numbers<[1], [0], [0], [1], [0, 0, 1, 1], [], []>} : vector<16x84xbf16>, vector<84x160xbf16>, vector<16x160xf32> -> vector<16x160xf32>
    %c0_9 = arith.constant 0 : index
    %c0_10 = arith.constant 0 : index
    %8 = vector.load %arg5[%c0_9, %c0_10] : memref<16x160xf32, #tpu.memory_space<vmem>>, vector<16x160xf32>
    %c15_i32 = arith.constant 15 : i32
    %9 = tpu.dynamic_rotate %7 by %c15_i32 dim 0 : vector<16x160xf32>, i32 -> vector<16x160xf32>
    %10 = arith.addf %8, %9 : vector<16x160xf32>
    %c0_11 = arith.constant 0 : index
    %c0_12 = arith.constant 0 : index
    %11 = vector.load %arg5[%c0_11, %c0_12] : memref<16x160xf32, #tpu.memory_space<vmem>>, vector<16x160xf32>
    tpu.vector_store %arg5[%c0_11, %c0_12], %10 {strides = array<i32>} : memref<16x160xf32, #tpu.memory_space<vmem>>, vector<16x160xf32>,
    %c2 = arith.constant 2 : index
    %c0_13 = arith.constant 0 : index
    %c0_14 = arith.constant 0 : index
    %12 = vector.load %arg2[%c2, %c0_13, %c0_14] : memref<5x84x160xbf16, #tpu.memory_space<vmem>>, vector<1x84x160xbf16>
    %13 = vector.shape_cast %12 : vector<1x84x160xbf16> to vector<84x160xbf16>
    %cst_15 = arith.constant dense<0.000000e+00> : vector<16x160xf32>
    %14 = tpu.matmul %0, %13, %cst_15 {dimension_numbers = #tpu.dot_dimension_numbers<[1], [0], [0], [1], [0, 0, 1, 1], [], []>} : vector<16x84xbf16>, vector<84x160xbf16>, vector<16x160xf32> -> vector<16x160xf32>
    %c0_16 = arith.constant 0 : index
    %c0_17 = arith.constant 0 : index
    %15 = vector.load %arg5[%c0_16, %c0_17] : memref<16x160xf32, #tpu.memory_space<vmem>>, vector<16x160xf32>
    %c14_i32 = arith.constant 14 : i32
    %16 = tpu.dynamic_rotate %14 by %c14_i32 dim 0 : vector<16x160xf32>, i32 -> vector<16x160xf32>
    %17 = arith.addf %15, %16 : vector<16x160xf32>
    %c0_18 = arith.constant 0 : index
    %c0_19 = arith.constant 0 : index
    %18 = vector.load %arg5[%c0_18, %c0_19] : memref<16x160xf32, #tpu.memory_space<vmem>>, vector<16x160xf32>
    tpu.vector_store %arg5[%c0_18, %c0_19], %17 {strides = array<i32>} : memref<16x160xf32, #tpu.memory_space<vmem>>, vector<16x160xf32>,
    %c3 = arith.constant 3 : index
    %c0_20 = arith.constant 0 : index
    %c0_21 = arith.constant 0 : index
    %19 = vector.load %arg2[%c3, %c0_20, %c0_21] : memref<5x84x160xbf16, #tpu.memory_space<vmem>>, vector<1x84x160xbf16>
    %20 = vector.shape_cast %19 : vector<1x84x160xbf16> to vector<84x160xbf16>
    %cst_22 = arith.constant dense<0.000000e+00> : vector<16x160xf32>
    %21 = tpu.matmul %0, %20, %cst_22 {dimension_numbers = #tpu.dot_dimension_numbers<[1], [0], [0], [1], [0, 0, 1, 1], [], []>} : vector<16x84xbf16>, vector<84x160xbf16>, vector<16x160xf32> -> vector<16x160xf32>
    %c0_23 = arith.constant 0 : index
    %c0_24 = arith.constant 0 : index
    %22 = vector.load %arg5[%c0_23, %c0_24] : memref<16x160xf32, #tpu.memory_space<vmem>>, vector<16x160xf32>
    %c13_i32 = arith.constant 13 : i32
    %23 = tpu.dynamic_rotate %21 by %c13_i32 dim 0 : vector<16x160xf32>, i32 -> vector<16x160xf32>
    %24 = arith.addf %22, %23 : vector<16x160xf32>
    %c0_25 = arith.constant 0 : index
    %c0_26 = arith.constant 0 : index
    %25 = vector.load %arg5[%c0_25, %c0_26] : memref<16x160xf32, #tpu.memory_space<vmem>>, vector<16x160xf32>
    tpu.vector_store %arg5[%c0_25, %c0_26], %24 {strides = array<i32>} : memref<16x160xf32, #tpu.memory_space<vmem>>, vector<16x160xf32>,
    %c4 = arith.constant 4 : index
    %c0_27 = arith.constant 0 : index
    %c0_28 = arith.constant 0 : index
    %26 = vector.load %arg2[%c4, %c0_27, %c0_28] : memref<5x84x160xbf16, #tpu.memory_space<vmem>>, vector<1x84x160xbf16>
    %27 = vector.shape_cast %26 : vector<1x84x160xbf16> to vector<84x160xbf16>
    %cst_29 = arith.constant dense<0.000000e+00> : vector<16x160xf32>
    %28 = tpu.matmul %0, %27, %cst_29 {dimension_numbers = #tpu.dot_dimension_numbers<[1], [0], [0], [1], [0, 0, 1, 1], [], []>} : vector<16x84xbf16>, vector<84x160xbf16>, vector<16x160xf32> -> vector<16x160xf32>
    %c0_30 = arith.constant 0 : index
    %c0_31 = arith.constant 0 : index
    %29 = vector.load %arg5[%c0_30, %c0_31] : memref<16x160xf32, #tpu.memory_space<vmem>>, vector<16x160xf32>
    %c12_i32 = arith.constant 12 : i32
    %30 = tpu.dynamic_rotate %28 by %c12_i32 dim 0 : vector<16x160xf32>, i32 -> vector<16x160xf32>
    %31 = arith.addf %29, %30 : vector<16x160xf32>
    %c0_32 = arith.constant 0 : index
    %c0_33 = arith.constant 0 : index
    %32 = vector.load %arg5[%c0_32, %c0_33] : memref<16x160xf32, #tpu.memory_space<vmem>>, vector<16x160xf32>
    tpu.vector_store %arg5[%c0_32, %c0_33], %31 {strides = array<i32>} : memref<16x160xf32, #tpu.memory_space<vmem>>, vector<16x160xf32>,
    %c0_34 = arith.constant 0 : index
    %c0_35 = arith.constant 0 : index
    %33 = vector.load %arg5[%c0_34, %c0_35] : memref<16x160xf32, #tpu.memory_space<vmem>>, vector<16x160xf32>
    %c0_36 = arith.constant 0 : index
    %c0_37 = arith.constant 0 : index
    %34 = vector.load %arg3[%c0_36, %c0_37] : memref<1x160xf32, #tpu.memory_space<vmem>>, vector<1x160xf32>
    %35 = vector.broadcast %34 : vector<1x160xf32> to vector<16x160xf32>
    %36 = arith.addf %33, %35 : vector<16x160xf32>
    %cst_38 = arith.constant 0.000000e+00 : f32
    %37 = vector.broadcast %cst_38 : f32 to vector<16x160xf32>
    %38 = arith.maximumf %36, %37 : vector<16x160xf32>
    %39 = arith.truncf %38 : vector<16x160xf32> to vector<16x160xbf16>
    %c0_39 = arith.constant 0 : index
    %c0_40 = arith.constant 0 : index
    %40 = vector.load %arg4[%c0_39, %c0_40] : memref<16x160xbf16, #tpu.memory_space<vmem>>, vector<16x160xbf16>
    tpu.vector_store %arg4[%c0_39, %c0_40], %39 {strides = array<i32>} : memref<16x160xbf16, #tpu.memory_space<vmem>>, vector<16x160xbf16>,
    return
  }
  func.func @transform_0(%arg0: i32) -> (i32, i32) {
    %c0_i32 = arith.constant 0 : i32
    %c0_i32_0 = arith.constant 0 : i32
    return %arg0, %c0_i32 : i32, i32
  }
  func.func @transform_1(%arg0: i32) -> (i32, i32, i32) {
    %c0_i32 = arith.constant 0 : i32
    %c0_i32_0 = arith.constant 0 : i32
    %c0_i32_1 = arith.constant 0 : i32
    %c0_i32_2 = arith.constant 0 : i32
    return %c0_i32, %c0_i32_0, %c0_i32_1 : i32, i32, i32
  }
  func.func @transform_2(%arg0: i32) -> (i32, i32) {
    %c0_i32 = arith.constant 0 : i32
    %c0_i32_0 = arith.constant 0 : i32
    %c0_i32_1 = arith.constant 0 : i32
    return %c0_i32, %c0_i32_0 : i32, i32
  }
  func.func @transform_3(%arg0: i32) -> (i32, i32) {
    %c0_i32 = arith.constant 0 : i32
    %c0_i32_0 = arith.constant 0 : i32
    return %arg0, %c0_i32 : i32, i32
  }
}

module attributes {stable_mosaic.version = 11 : i64} {
  func.func @_fc_stack_kernel(%arg0: i32, %arg1: memref<8x400xbf16, #tpu.memory_space<vmem>>, %arg2: memref<400x128xbf16, #tpu.memory_space<vmem>>, %arg3: memref<1x128xf32, #tpu.memory_space<vmem>>, %arg4: memref<128x128xbf16, #tpu.memory_space<vmem>>, %arg5: memref<1x128xf32, #tpu.memory_space<vmem>>, %arg6: memref<128x128xbf16, #tpu.memory_space<vmem>>, %arg7: memref<1x128xf32, #tpu.memory_space<vmem>>, %arg8: memref<8x128xf32, #tpu.memory_space<vmem>>) attributes {dimension_semantics = [#tpu.dimension_semantics<parallel>], iteration_bounds = array<i64: 2>, scalar_prefetch = 0 : i64, scratch_operands = 0 : i64, tpu.core_type = #tpu.core_type<tc>, window_params = [{transform_indices = @transform_0, window_bounds = array<i64: 8, 400>}, {pipeline_mode = #tpu.pipeline_mode<synchronous>, transform_indices = @transform_1, window_bounds = array<i64: 400, 128>}, {pipeline_mode = #tpu.pipeline_mode<synchronous>, transform_indices = @transform_2, window_bounds = array<i64: 1, 128>}, {pipeline_mode = #tpu.pipeline_mode<synchronous>, transform_indices = @transform_3, window_bounds = array<i64: 128, 128>}, {pipeline_mode = #tpu.pipeline_mode<synchronous>, transform_indices = @transform_4, window_bounds = array<i64: 1, 128>}, {pipeline_mode = #tpu.pipeline_mode<synchronous>, transform_indices = @transform_5, window_bounds = array<i64: 128, 128>}, {pipeline_mode = #tpu.pipeline_mode<synchronous>, transform_indices = @transform_6, window_bounds = array<i64: 1, 128>}, {transform_indices = @transform_7, window_bounds = array<i64: 8, 128>}]} {
    %c0 = arith.constant 0 : index
    %c0_0 = arith.constant 0 : index
    %0 = vector.load %arg1[%c0, %c0_0] : memref<8x400xbf16, #tpu.memory_space<vmem>>, vector<8x400xbf16>
    %c0_1 = arith.constant 0 : index
    %c0_2 = arith.constant 0 : index
    %1 = vector.load %arg2[%c0_1, %c0_2] : memref<400x128xbf16, #tpu.memory_space<vmem>>, vector<400x128xbf16>
    %cst = arith.constant dense<0.000000e+00> : vector<8x128xf32>
    %2 = tpu.matmul %0, %1, %cst {dimension_numbers = #tpu.dot_dimension_numbers<[1], [0], [0], [1], [0, 0, 1, 1], [], []>} : vector<8x400xbf16>, vector<400x128xbf16>, vector<8x128xf32> -> vector<8x128xf32>
    %c0_3 = arith.constant 0 : index
    %c0_4 = arith.constant 0 : index
    %3 = vector.load %arg3[%c0_3, %c0_4] : memref<1x128xf32, #tpu.memory_space<vmem>>, vector<1x128xf32>
    %4 = vector.broadcast %3 : vector<1x128xf32> to vector<8x128xf32>
    %5 = arith.addf %2, %4 : vector<8x128xf32>
    %cst_5 = arith.constant 0.000000e+00 : f32
    %6 = vector.broadcast %cst_5 : f32 to vector<8x128xf32>
    %7 = arith.maximumf %5, %6 : vector<8x128xf32>
    %8 = arith.truncf %7 : vector<8x128xf32> to vector<8x128xbf16>
    %c0_6 = arith.constant 0 : index
    %c0_7 = arith.constant 0 : index
    %9 = vector.load %arg4[%c0_6, %c0_7] : memref<128x128xbf16, #tpu.memory_space<vmem>>, vector<128x128xbf16>
    %cst_8 = arith.constant dense<0.000000e+00> : vector<8x128xf32>
    %10 = tpu.matmul %8, %9, %cst_8 {dimension_numbers = #tpu.dot_dimension_numbers<[1], [0], [0], [1], [0, 0, 1, 1], [], []>} : vector<8x128xbf16>, vector<128x128xbf16>, vector<8x128xf32> -> vector<8x128xf32>
    %c0_9 = arith.constant 0 : index
    %c0_10 = arith.constant 0 : index
    %11 = vector.load %arg5[%c0_9, %c0_10] : memref<1x128xf32, #tpu.memory_space<vmem>>, vector<1x128xf32>
    %12 = vector.broadcast %11 : vector<1x128xf32> to vector<8x128xf32>
    %13 = arith.addf %10, %12 : vector<8x128xf32>
    %cst_11 = arith.constant 0.000000e+00 : f32
    %14 = vector.broadcast %cst_11 : f32 to vector<8x128xf32>
    %15 = arith.maximumf %13, %14 : vector<8x128xf32>
    %16 = arith.truncf %15 : vector<8x128xf32> to vector<8x128xbf16>
    %c0_12 = arith.constant 0 : index
    %c0_13 = arith.constant 0 : index
    %17 = vector.load %arg6[%c0_12, %c0_13] : memref<128x128xbf16, #tpu.memory_space<vmem>>, vector<128x128xbf16>
    %cst_14 = arith.constant dense<0.000000e+00> : vector<8x128xf32>
    %18 = tpu.matmul %16, %17, %cst_14 {dimension_numbers = #tpu.dot_dimension_numbers<[1], [0], [0], [1], [0, 0, 1, 1], [], []>} : vector<8x128xbf16>, vector<128x128xbf16>, vector<8x128xf32> -> vector<8x128xf32>
    %c0_15 = arith.constant 0 : index
    %c0_16 = arith.constant 0 : index
    %19 = vector.load %arg7[%c0_15, %c0_16] : memref<1x128xf32, #tpu.memory_space<vmem>>, vector<1x128xf32>
    %20 = vector.broadcast %19 : vector<1x128xf32> to vector<8x128xf32>
    %21 = arith.addf %18, %20 : vector<8x128xf32>
    %c0_17 = arith.constant 0 : index
    %c0_18 = arith.constant 0 : index
    %22 = vector.load %arg8[%c0_17, %c0_18] : memref<8x128xf32, #tpu.memory_space<vmem>>, vector<8x128xf32>
    tpu.vector_store %arg8[%c0_17, %c0_18], %21 {strides = array<i32>} : memref<8x128xf32, #tpu.memory_space<vmem>>, vector<8x128xf32>,
    return
  }
  func.func @transform_0(%arg0: i32) -> (i32, i32) {
    %c0_i32 = arith.constant 0 : i32
    %c0_i32_0 = arith.constant 0 : i32
    return %arg0, %c0_i32 : i32, i32
  }
  func.func @transform_1(%arg0: i32) -> (i32, i32) {
    %c0_i32 = arith.constant 0 : i32
    %c0_i32_0 = arith.constant 0 : i32
    %c0_i32_1 = arith.constant 0 : i32
    return %c0_i32, %c0_i32_0 : i32, i32
  }
  func.func @transform_2(%arg0: i32) -> (i32, i32) {
    %c0_i32 = arith.constant 0 : i32
    %c0_i32_0 = arith.constant 0 : i32
    %c0_i32_1 = arith.constant 0 : i32
    return %c0_i32, %c0_i32_0 : i32, i32
  }
  func.func @transform_3(%arg0: i32) -> (i32, i32) {
    %c0_i32 = arith.constant 0 : i32
    %c0_i32_0 = arith.constant 0 : i32
    %c0_i32_1 = arith.constant 0 : i32
    return %c0_i32, %c0_i32_0 : i32, i32
  }
  func.func @transform_4(%arg0: i32) -> (i32, i32) {
    %c0_i32 = arith.constant 0 : i32
    %c0_i32_0 = arith.constant 0 : i32
    %c0_i32_1 = arith.constant 0 : i32
    return %c0_i32, %c0_i32_0 : i32, i32
  }
  func.func @transform_5(%arg0: i32) -> (i32, i32) {
    %c0_i32 = arith.constant 0 : i32
    %c0_i32_0 = arith.constant 0 : i32
    %c0_i32_1 = arith.constant 0 : i32
    return %c0_i32, %c0_i32_0 : i32, i32
  }
  func.func @transform_6(%arg0: i32) -> (i32, i32) {
    %c0_i32 = arith.constant 0 : i32
    %c0_i32_0 = arith.constant 0 : i32
    %c0_i32_1 = arith.constant 0 : i32
    return %c0_i32, %c0_i32_0 : i32, i32
  }
  func.func @transform_7(%arg0: i32) -> (i32, i32) {
    %c0_i32 = arith.constant 0 : i32
    %c0_i32_0 = arith.constant 0 : i32
    return %arg0, %c0_i32 : i32, i32
  }
}

</mosaic_0001>

<llo_original>
// kernel: net_forward.3
$region0: #{net_forward.3}
  #allocation0 [shape = 'u32[]', space=smem, size = 0x4, offset = 0x4, fixed_abs, tag = 'smem constant byte address 0x4 - core index']
  #allocation1 [shape = 'u32[144,128]{1,0:T(1,128)}', space=vmem, size = 0x12000, scoped, tag = 'internal scratch']
  #allocation2 [shape = 'f32[32,168]{1,0:T(8,128)}', space=vmem, size = 0x8000, scoped, tag = 'scratch operand']
  %s0 = inlined_call_operand.vmem [shape: bf16[128,96], index: 0, kind: input, shape index: {}]
  %s1 = inlined_call_operand.vmem [shape: bf16[5,96,168], index: 1, kind: input, shape index: {}]
  %s2 = inlined_call_operand.vmem [shape: f32[1,168], index: 2, kind: input, shape index: {}]
  %s3 = inlined_call_operand.vmem [shape: bf16[128,168], index: 3, kind: output, shape index: {}]
  %s4 = sld [smem:[#allocation0]]
  $region45: #{net_forward.3} parent=0
    _
  %s6 = ssub.s32 1, %s4
  %s7 = scalar_select 0, %s6, %s4
  loop: start=0, step=1, limit=6
  $region2: #{net_forward.3} parent=0 // loop_pre_header
    _
  $region3: #{net_forward.3} parent=0 // loop_header
    %s9 = sphi 0, %s13
    %p10 = scmp.ge.s32.totalorder %s9, 6
    %s19 = sphi 0, %s21
    %s22 = sphi 0, %s19
    %s23 = sphi 0, %s22
    %s39 = sphi 0, %s23
    %s43 = sphi 0, %s43
    %s45 = sphi 0, %s43
    %s46 = sphi 0, %s45
    %s60 = sphi 0, %s46
    %s64 = sphi 0, %s64
    %s66 = sphi 0, %s64
    %s67 = sphi 0, %s66
    %s81 = sphi 0, %s67
    %s87 = sphi 0, %s89
    %s90 = sphi 0, %s87
    %s91 = sphi 0, %s90
    %s107 = sphi 0, %s91
  $region4: #{net_forward.3} parent=0 // loop_header_branch
    %12 = sbr.rel (%p10) target = $region8
  $region5: #{net_forward.3} parent=0 // loop_body
    %s14 = ssub.s32 %s9, 1
    %s15 = ssub.s32 %s9, 2
    %s16 = sadd.s32 %s9, 1
    %s17 = ssub.s32 %s9, %s16
    %p18 = scmp.eq.s32.totalorder %s17, 0
    %s20 = sadd.s32 %s19, 1
    %s21 = scalar_select %p18, %s19, %s20
    %p24 = pneg %p18
    %p25 = scmp.eq.s32.totalorder %s9, 3
    %p26 = por %p24, %p25
    %p27 = scmp.ne.s32.totalorder %s19, %s22
    %p28 = scmp.eq.s32.totalorder %s9, 0
    %p29 = por %p27, %p28
    %p30 = scmp.ne.s32.totalorder %s19, %s22
    %p31 = scmp.eq.s32.totalorder %s14, 3
    %p32 = por %p30, %p31
    %p33 = scmp.ne.s32.totalorder %s22, %s23
    %p34 = scmp.eq.s32.totalorder %s14, 0
    %p35 = por %p33, %p34
    %p36 = scmp.ne.s32.totalorder %s22, %s23
    %p37 = scmp.eq.s32.totalorder %s15, 3
    %p38 = por %p36, %p37
    %p40 = scmp.ne.s32.totalorder %s23, %s39
    %p41 = scmp.eq.s32.totalorder %s15, 0
    %p42 = por %p40, %p41
    %s44 = sadd.s32 %s43, 1
    %p47 = scmp.eq.s32.totalorder %s9, 3
    %p48 = scmp.ne.s32.totalorder %s43, %s45
    %p49 = scmp.eq.s32.totalorder %s9, 0
    %p50 = por %p48, %p49
    %p51 = scmp.ne.s32.totalorder %s43, %s45
    %p52 = scmp.eq.s32.totalorder %s14, 3
    %p53 = por %p51, %p52
    %p54 = scmp.ne.s32.totalorder %s45, %s46
    %p55 = scmp.eq.s32.totalorder %s14, 0
    %p56 = por %p54, %p55
    %p57 = scmp.ne.s32.totalorder %s45, %s46
    %p58 = scmp.eq.s32.totalorder %s15, 3
    %p59 = por %p57, %p58
    %p61 = scmp.ne.s32.totalorder %s46, %s60
    %p62 = scmp.eq.s32.totalorder %s15, 0
    %p63 = por %p61, %p62
    %s65 = sadd.s32 %s64, 1
    %p68 = scmp.eq.s32.totalorder %s9, 3
    %p69 = scmp.ne.s32.totalorder %s64, %s66
    %p70 = scmp.eq.s32.totalorder %s9, 0
    %p71 = por %p69, %p70
    %p72 = scmp.ne.s32.totalorder %s64, %s66
    %p73 = scmp.eq.s32.totalorder %s14, 3
    %p74 = por %p72, %p73
    %p75 = scmp.ne.s32.totalorder %s66, %s67
    %p76 = scmp.eq.s32.totalorder %s14, 0
    %p77 = por %p75, %p76
    %p78 = scmp.ne.s32.totalorder %s66, %s67
    %p79 = scmp.eq.s32.totalorder %s15, 3
    %p80 = por %p78, %p79
    %p82 = scmp.ne.s32.totalorder %s67, %s81
    %p83 = scmp.eq.s32.totalorder %s15, 0
    %p84 = por %p82, %p83
    %s85 = ssub.s32 %s9, %s16
    %p86 = scmp.eq.s32.totalorder %s85, 0
    %s88 = sadd.s32 %s87, 1
    %s89 = scalar_select %p86, %s87, %s88
    %p92 = pneg %p86
    %p93 = scmp.eq.s32.totalorder %s9, 3
    %p94 = por %p92, %p93
    %p95 = scmp.ne.s32.totalorder %s87, %s90
    %p96 = scmp.eq.s32.totalorder %s9, 0
    %p97 = por %p95, %p96
    %p98 = scmp.ne.s32.totalorder %s87, %s90
    %p99 = scmp.eq.s32.totalorder %s14, 3
    %p100 = por %p98, %p99
    %p101 = scmp.ne.s32.totalorder %s90, %s91
    %p102 = scmp.eq.s32.totalorder %s14, 0
    %p103 = por %p101, %p102
    %p104 = scmp.ne.s32.totalorder %s90, %s91
    %p105 = scmp.eq.s32.totalorder %s15, 3
    %p106 = por %p104, %p105
    %p108 = scmp.ne.s32.totalorder %s91, %s107
    %p109 = scmp.eq.s32.totalorder %s15, 0
    %p110 = por %p108, %p109
    %p111 = scmp.le.s32.totalorder 1, %s9
    %p112 = scmp.lt.s32.totalorder %s9, 5
    %p113 = pnand %p111, %p112
    %p114 = pneg %p113
    // Predicated region
    $region9: #{net_forward.3} parent=5 // pred_check
      _
    $region10: #{net_forward.3} parent=5 // pred_check_branch
      %116 = sbr.rel (%p113) target = $region12
    $region11: #{net_forward.3} parent=5 // pred_region
      %s117 = ssub.s32 %s9, 1
      // Predicated region
      $region13: #{net_forward.3} parent=11 // pred_check
        %p118 = pneg %p56
      $region14: #{net_forward.3} parent=11 // pred_check_branch
        %120 = sbr.rel (%p118) target = $region16
      $region15: #{net_forward.3} parent=11 // pred_region
        _
      $region16: #{net_forward.3} parent=11 // pred_fallthru
        _
      // Predicated region
      $region17: #{net_forward.3} parent=11 // pred_check
        %p121 = pneg %p77
      $region18: #{net_forward.3} parent=11 // pred_check_branch
        %123 = sbr.rel (%p121) target = $region20
      $region19: #{net_forward.3} parent=11 // pred_region
        _
      $region20: #{net_forward.3} parent=11 // pred_fallthru
        _
    $region12: #{net_forward.3} parent=5 // pred_fallthru
      _
    %p124 = scmp.lt.s32.totalorder %s9, 4
    // Predicated region
    $region21: #{net_forward.3} parent=5 // pred_check
      %p125 = pneg %p124
    $region22: #{net_forward.3} parent=5 // pred_check_branch
      %127 = sbr.rel (%p125) target = $region24
    $region23: #{net_forward.3} parent=5 // pred_region
      // Predicated region
      $region25: #{net_forward.3} parent=23 // pred_check
        %p128 = pneg %p29
      $region26: #{net_forward.3} parent=23 // pred_check_branch
        %130 = sbr.rel (%p128) target = $region28
      $region27: #{net_forward.3} parent=23 // pred_region
        %s131 = smul.u32 4, %s9
        %p132 = scmp.lt.s32.totalorder %s131, 15
        %s133 = scalar_select %p132, %s131, 15
        %s134 = smul.addr %s133, 4
        %s135 = scalar_lea.vmem %s0, %s134
        %s136 = smul.u32 4, %s9
      $region28: #{net_forward.3} parent=23 // pred_fallthru
        _
    $region24: #{net_forward.3} parent=5 // pred_fallthru
      _
    %p137 = scmp.le.s32.totalorder 1, %s9
    %p138 = scmp.lt.s32.totalorder %s9, 5
    %p139 = pnand %p137, %p138
    %p140 = pneg %p139
    // Predicated region
    $region29: #{net_forward.3} parent=5 // pred_check
      _
    $region30: #{net_forward.3} parent=5 // pred_check_branch
      %142 = sbr.rel (%p139) target = $region32
    $region31: #{net_forward.3} parent=5 // pred_region
      %s143 = ssub.s32 %s9, 1
      %s144 = smul.u32 4, %s14
      %p145 = scmp.lt.s32.totalorder %s144, 15
      %s146 = scalar_select %p145, %s144, 15
      %s147 = smul.addr %s146, 4
      %s148 = scalar_lea.vmem %s0, %s147
      %p149 = pneg %p35
      %p150 = pneg %p32
      %p151 = pneg %p56
      %p152 = pneg %p53
      %p153 = pneg %p77
      %p154 = pneg %p74
      %p155 = pneg %p103
      %p156 = pneg %p100
      %s157 = smul.u32 4, %s14
      %p158 = scmp.lt.s32.totalorder %s157, 15
      %s159 = scalar_select %p158, %s157, 15
      %s160 = smul.addr %s159, 2
      %s161 = smul.addr %s160, 4
      %s162 = scalar_lea.vmem %s3, %s161
      %s163 = smul.u32 4, %s14
      %p164 = scmp.lt.s32.totalorder %s163, 15
      %s165 = scalar_select %p164, %s163, 15
      %s166 = smul.addr %s165, 4
      %s167 = scalar_lea.vmem %s0, %s166
      %s168 = smul.u32 4, %s14
      %s169 = smul.u32 4, %s14
      %p170 = scmp.lt.s32.totalorder %s169, 15
      %s171 = scalar_select %p170, %s169, 15
      %s172 = smul.addr %s171, 2
      %s173 = smul.addr %s172, 4
      %s174 = scalar_lea.vmem %s3, %s173
      %s175 = smul.u32 4, %s14
      %v177 = vld [vmem:[%s167] sm:$0xf]
      %v178 = vld [vmem:[%s167 + $0x4] sm:$0xf]
      %v179 = vld [vmem:[%s167 + $0x8] sm:$0xf]
      %v180 = vld [vmem:[%s167 + $0xc] sm:$0xf]
      %v181 = vld [vmem:[%s1] sm:$0xff]
      %v182 = vld [vmem:[%s1 + $0x8] sm:$0xff]
      %v183 = vld [vmem:[%s1 + $0x10] sm:$0xff]
      %v184 = vld [vmem:[%s1 + $0x18] sm:$0xff]
      %v185 = vld [vmem:[%s1 + $0x20] sm:$0xff]
      %v186 = vld [vmem:[%s1 + $0x28] sm:$0xff]
      %v187 = vld [vmem:[%s1 + $0x30] sm:$0xff]
      %v188 = vld [vmem:[%s1 + $0x38] sm:$0xff]
      %v189 = vld [vmem:[%s1 + $0x40] sm:$0xff]
      %v190 = vld [vmem:[%s1 + $0x48] sm:$0xff]
      %v191 = vld [vmem:[%s1 + $0x50] sm:$0xff]
      %v192 = vld [vmem:[%s1 + $0x58] sm:$0xff]
      %v197 = vunpack.c.l.b16 %v177
      %v198 = vunpack.c.l.b16 %v178
      %v199 = vunpack.c.l.b16 %v179
      %v200 = vunpack.c.l.b16 %v180
      %v201 = vpack.c.b16 %v198, %v197
      %v202 = vpack.c.b16 %v200, %v199
      %v215 = vunpack.c.l.b16 %v181
      %v216 = vunpack.c.h.b16 %v181
      %v217 = vunpack.c.l.b16 %v182
      %v218 = vunpack.c.h.b16 %v182
      %v219 = vunpack.c.l.b16 %v183
      %v220 = vunpack.c.h.b16 %v183
      %v221 = vunpack.c.l.b16 %v184
      %v222 = vunpack.c.h.b16 %v184
      %v223 = vunpack.c.l.b16 %v185
      %v224 = vunpack.c.h.b16 %v185
      %v225 = vunpack.c.l.b16 %v186
      %v226 = vunpack.c.h.b16 %v186
      %v227 = vunpack.c.l.b16 %v187
      %v228 = vunpack.c.h.b16 %v187
      %v229 = vunpack.c.l.b16 %v188
      %v230 = vunpack.c.h.b16 %v188
      %v231 = vunpack.c.l.b16 %v189
      %v232 = vunpack.c.h.b16 %v189
      %v233 = vunpack.c.l.b16 %v190
      %v234 = vunpack.c.h.b16 %v190
      %v235 = vunpack.c.l.b16 %v191
      %v236 = vunpack.c.h.b16 %v191
      %v237 = vunpack.c.l.b16 %v192
      %v238 = vunpack.c.h.b16 %v192
      %v239 = vpack.c.b16 %v217, %v215
      %v240 = vpack.c.b16 %v218, %v216
      %v241 = vpack.c.b16 %v221, %v219
      %v242 = vpack.c.b16 %v222, %v220
      %v243 = vpack.c.b16 %v225, %v223
      %v244 = vpack.c.b16 %v226, %v224
      %v245 = vpack.c.b16 %v229, %v227
      %v246 = vpack.c.b16 %v230, %v228
      %v247 = vpack.c.b16 %v233, %v231
      %v248 = vpack.c.b16 %v234, %v232
      %v249 = vpack.c.b16 %v237, %v235
      %v250 = vpack.c.b16 %v238, %v236
      %vm263 = vcmask 785408
      %v265 = vsel %vm263, %v201, 0
      %v268 = vsel %vm263, %v202, 0
      %270 = vmatprep.subr.bf16.mxu0 %v240
      %271 = vmatpush1.bf16.msra.mxu0 %v239
      %272 = vmatprep.subr.bf16.mxu0 %v242
      %273 = vmatpush1.bf16.msra.mxu0 %v241
      %274 = vmatprep.subr.bf16.mxu0 %v244
      %275 = vmatpush1.bf16.msra.mxu0 %v243
      %276 = vmatprep.subr.bf16.mxu0 %v246
      %277 = vmatpush1.bf16.msra.mxu0 %v245
      %278 = vmatprep.subr.bf16.mxu0 %v248
      %279 = vmatpush1.bf16.msra.mxu0 %v247
      %280 = vmatprep.subr.bf16.mxu0 %v250
      %281 = vmatpush1.bf16.msra.mxu0 %v249
      %282 = vmatprep.subr.bf16.mxu0 0
      %283 = vmatpush1.bf16.msra.mxu0 0
      %284 = vmatprep.subr.bf16.mxu0 0
      %285 = vmatpush1.bf16.msra.mxu0 0
      %286 = vmatprep.subr.bf16.mxu0 0
      %287 = vmatpush1.bf16.msra.mxu0 0
      %288 = vmatprep.subr.bf16.mxu0 0
      %289 = vmatpush1.bf16.msra.mxu0 0
      %290 = vmatprep.subr.bf16.mxu0 0
      %291 = vmatpush1.bf16.msra.mxu0 0
      %292 = vmatprep.subr.bf16.mxu0 0
      %293 = vmatpush1.bf16.msra.mxu0 0
      %294 = vmatprep.subr.bf16.mxu0 0
      %295 = vmatpush1.bf16.msra.mxu0 0
      %296 = vmatprep.subr.bf16.mxu0 0
      %297 = vmatpush1.bf16.msra.mxu0 0
      %298 = vmatprep.subr.bf16.mxu0 0
      %299 = vmatpush1.bf16.msra.mxu0 0
      %300 = vmatprep.subr.bf16.mxu0 0
      %301 = vmatpush1.bf16.msra.mxu0 0
      %302 = vmatprep.mubr.bf16.mxu0 0
      %303 = vmatmul.mubr.bf16.gmra.mrb[0].mxu0 %v265
      %v304 = vpop.f32.mrb[0].mxu0
      %v305 = vadd.f32 0.0, %v304
      %v306 = vpop.f32.mrb[0].mxu0
      %v307 = vadd.f32 0.0, %v306
      %v308 = vpop.f32.mrb[0].mxu0
      %v309 = vadd.f32 0.0, %v308
      %v310 = vpop.f32.mrb[0].mxu0
      %v311 = vadd.f32 0.0, %v310
      %312 = vmatprep.mubr.bf16.mxu0 0
      %313 = vmatmul.mubr.bf16.gmra.mrb[0].mxu0 %v268
      %v314 = vpop.f32.mrb[0].mxu0
      %v315 = vadd.f32 0.0, %v314
      %v316 = vpop.f32.mrb[0].mxu0
      %v317 = vadd.f32 0.0, %v316
      %v318 = vpop.f32.mrb[0].mxu0
      %v319 = vadd.f32 0.0, %v318
      %v320 = vpop.f32.mrb[0].mxu0
      %v321 = vadd.f32 0.0, %v320
      %322 = vdwg.mxu0
      %323 = vst [vmem:[#allocation2] sm:$0xff] %v305
      %vm324 = vcmask 326656
      %325 = vst.msk [vmem:[#allocation2 + $0x8] sm:$0xff] %vm324, %v307
      %326 = vst [vmem:[#allocation2 + $0x10] sm:$0xff] %v309
      %327 = vst.msk [vmem:[#allocation2 + $0x18] sm:$0xff] %vm324, %v311
      %328 = vst [vmem:[#allocation2 + $0x20] sm:$0xff] %v315
      %329 = vst.msk [vmem:[#allocation2 + $0x28] sm:$0xff] %vm324, %v317
      %330 = vst [vmem:[#allocation2 + $0x30] sm:$0xff] %v319
      %331 = vst.msk [vmem:[#allocation2 + $0x38] sm:$0xff] %vm324, %v321
      %s332 = scalar_lea.vmem %s1, 96
      %v333 = vld [vmem:[%s332] sm:$0xff]
      %v334 = vld [vmem:[%s332 + $0x8] sm:$0xff]
      %v335 = vld [vmem:[%s332 + $0x10] sm:$0xff]
      %v336 = vld [vmem:[%s332 + $0x18] sm:$0xff]
      %v337 = vld [vmem:[%s332 + $0x20] sm:$0xff]
      %v338 = vld [vmem:[%s332 + $0x28] sm:$0xff]
      %v339 = vld [vmem:[%s332 + $0x30] sm:$0xff]
      %v340 = vld [vmem:[%s332 + $0x38] sm:$0xff]
      %v341 = vld [vmem:[%s332 + $0x40] sm:$0xff]
      %v342 = vld [vmem:[%s332 + $0x48] sm:$0xff]
      %v343 = vld [vmem:[%s332 + $0x50] sm:$0xff]
      %v344 = vld [vmem:[%s332 + $0x58] sm:$0xff]
      %v357 = vunpack.c.l.b16 %v333
      %v358 = vunpack.c.h.b16 %v333
      %v359 = vunpack.c.l.b16 %v334
      %v360 = vunpack.c.h.b16 %v334
      %v361 = vunpack.c.l.b16 %v335
      %v362 = vunpack.c.h.b16 %v335
      %v363 = vunpack.c.l.b16 %v336
      %v364 = vunpack.c.h.b16 %v336
      %v365 = vunpack.c.l.b16 %v337
      %v366 = vunpack.c.h.b16 %v337
      %v367 = vunpack.c.l.b16 %v338
      %v368 = vunpack.c.h.b16 %v338
      %v369 = vunpack.c.l.b16 %v339
      %v370 = vunpack.c.h.b16 %v339
      %v371 = vunpack.c.l.b16 %v340
      %v372 = vunpack.c.h.b16 %v340
      %v373 = vunpack.c.l.b16 %v341
      %v374 = vunpack.c.h.b16 %v341
      %v375 = vunpack.c.l.b16 %v342
      %v376 = vunpack.c.h.b16 %v342
      %v377 = vunpack.c.l.b16 %v343
      %v378 = vunpack.c.h.b16 %v343
      %v379 = vunpack.c.l.b16 %v344
      %v380 = vunpack.c.h.b16 %v344
      %v381 = vpack.c.b16 %v359, %v357
      %v382 = vpack.c.b16 %v360, %v358
      %v383 = vpack.c.b16 %v363, %v361
      %v384 = vpack.c.b16 %v364, %v362
      %v385 = vpack.c.b16 %v367, %v365
      %v386 = vpack.c.b16 %v368, %v366
      %v387 = vpack.c.b16 %v371, %v369
      %v388 = vpack.c.b16 %v372, %v370
      %v389 = vpack.c.b16 %v375, %v373
      %v390 = vpack.c.b16 %v376, %v374
      %v391 = vpack.c.b16 %v379, %v377
      %v392 = vpack.c.b16 %v380, %v378
      %405 = vmatprep.subr.bf16.mxu0 %v382
      %406 = vmatpush1.bf16.msra.mxu0 %v381
      %407 = vmatprep.subr.bf16.mxu0 %v384
      %408 = vmatpush1.bf16.msra.mxu0 %v383
      %409 = vmatprep.subr.bf16.mxu0 %v386
      %410 = vmatpush1.bf16.msra.mxu0 %v385
      %411 = vmatprep.subr.bf16.mxu0 %v388
      %412 = vmatpush1.bf16.msra.mxu0 %v387
      %413 = vmatprep.subr.bf16.mxu0 %v390
      %414 = vmatpush1.bf16.msra.mxu0 %v389
      %415 = vmatprep.subr.bf16.mxu0 %v392
      %416 = vmatpush1.bf16.msra.mxu0 %v391
      %417 = vmatprep.subr.bf16.mxu0 0
      %418 = vmatpush1.bf16.msra.mxu0 0
      %419 = vmatprep.subr.bf16.mxu0 0
      %420 = vmatpush1.bf16.msra.mxu0 0
      %421 = vmatprep.subr.bf16.mxu0 0
      %422 = vmatpush1.bf16.msra.mxu0 0
      %423 = vmatprep.subr.bf16.mxu0 0
      %424 = vmatpush1.bf16.msra.mxu0 0
      %425 = vmatprep.subr.bf16.mxu0 0
      %426 = vmatpush1.bf16.msra.mxu0 0
      %427 = vmatprep.subr.bf16.mxu0 0
      %428 = vmatpush1.bf16.msra.mxu0 0
      %429 = vmatprep.subr.bf16.mxu0 0
      %430 = vmatpush1.bf16.msra.mxu0 0
      %431 = vmatprep.subr.bf16.mxu0 0
      %432 = vmatpush1.bf16.msra.mxu0 0
      %433 = vmatprep.subr.bf16.mxu0 0
      %434 = vmatpush1.bf16.msra.mxu0 0
      %435 = vmatprep.subr.bf16.mxu0 0
      %436 = vmatpush1.bf16.msra.mxu0 0
      %437 = vmatprep.mubr.bf16.mxu0 0
      %438 = vmatmul.mubr.bf16.gmra.mrb[0].mxu0 %v265
      %v439 = vpop.f32.mrb[0].mxu0
      %v440 = vadd.f32 0.0, %v439
      %v441 = vpop.f32.mrb[0].mxu0
      %v442 = vadd.f32 0.0, %v441
      %v443 = vpop.f32.mrb[0].mxu0
      %v444 = vadd.f32 0.0, %v443
      %v445 = vpop.f32.mrb[0].mxu0
      %v446 = vadd.f32 0.0, %v445
      %447 = vmatprep.mubr.bf16.mxu0 0
      %448 = vmatmul.mubr.bf16.gmra.mrb[0].mxu0 %v268
      %v449 = vpop.f32.mrb[0].mxu0
      %v450 = vadd.f32 0.0, %v449
      %v451 = vpop.f32.mrb[0].mxu0
      %v452 = vadd.f32 0.0, %v451
      %v453 = vpop.f32.mrb[0].mxu0
      %v454 = vadd.f32 0.0, %v453
      %v455 = vpop.f32.mrb[0].mxu0
      %v456 = vadd.f32 0.0, %v455
      %457 = vdwg.mxu0
      %v458 = vld [vmem:[#allocation2] sm:$0xff]
      %v459 = vld [vmem:[#allocation2 + $0x8] sm:$0xff]
      %v460 = vld [vmem:[#allocation2 + $0x10] sm:$0xff]
      %v461 = vld [vmem:[#allocation2 + $0x18] sm:$0xff]
      %v462 = vld [vmem:[#allocation2 + $0x20] sm:$0xff]
      %v463 = vld [vmem:[#allocation2 + $0x28] sm:$0xff]
      %v464 = vld [vmem:[#allocation2 + $0x30] sm:$0xff]
      %v465 = vld [vmem:[#allocation2 + $0x38] sm:$0xff]
      %v466 = vrot.slane %v440, 1
      %v467 = vrot.slane %v442, 1
      %v468 = vrot.slane %v444, 1
      %v469 = vrot.slane %v446, 1
      %v470 = vrot.slane %v450, 1
      %v471 = vrot.slane %v452, 1
      %v472 = vrot.slane %v454, 1
      %v473 = vrot.slane %v456, 1
      %v474 = vlaneseq
      %v475 = vshrl.u32 %v474, 7
      %vm476 = vcmp.lt.s32.totalorder %v475, 7
      %v477 = vsel %vm476, %v470, %v472
      %v478 = vsel %vm476, %v471, %v473
      %v479 = vsel %vm476, %v468, %v470
      %v480 = vsel %vm476, %v469, %v471
      %v481 = vsel %vm476, %v466, %v468
      %v482 = vsel %vm476, %v467, %v469
      %v483 = vsel %vm476, %v472, %v466
      %v484 = vsel %vm476, %v473, %v467
      %v485 = vadd.f32 %v458, %v481
      %v486 = vadd.f32 %v459, %v482
      %v487 = vadd.f32 %v460, %v479
      %v488 = vadd.f32 %v461, %v480
      %v489 = vadd.f32 %v462, %v477
      %v490 = vadd.f32 %v463, %v478
      %v491 = vadd.f32 %v464, %v483
      %v492 = vadd.f32 %v465, %v484
      %493 = vst [vmem:[#allocation2] sm:$0xff] %v485
      %494 = vst.msk [vmem:[#allocation2 + $0x8] sm:$0xff] %vm324, %v486
      %495 = vst [vmem:[#allocation2 + $0x10] sm:$0xff] %v487
      %496 = vst.msk [vmem:[#allocation2 + $0x18] sm:$0xff] %vm324, %v488
      %497 = vst [vmem:[#allocation2 + $0x20] sm:$0xff] %v489
      %498 = vst.msk [vmem:[#allocation2 + $0x28] sm:$0xff] %vm324, %v490
      %499 = vst [vmem:[#allocation2 + $0x30] sm:$0xff] %v491
      %500 = vst.msk [vmem:[#allocation2 + $0x38] sm:$0xff] %vm324, %v492
      %s501 = scalar_lea.vmem %s1, 192
      %v502 = vld [vmem:[%s501] sm:$0xff]
      %v503 = vld [vmem:[%s501 + $0x8] sm:$0xff]
      %v504 = vld [vmem:[%s501 + $0x10] sm:$0xff]
      %v505 = vld [vmem:[%s501 + $0x18] sm:$0xff]
      %v506 = vld [vmem:[%s501 + $0x20] sm:$0xff]
      %v507 = vld [vmem:[%s501 + $0x28] sm:$0xff]
      %v508 = vld [vmem:[%s501 + $0x30] sm:$0xff]
      %v509 = vld [vmem:[%s501 + $0x38] sm:$0xff]
      %v510 = vld [vmem:[%s501 + $0x40] sm:$0xff]
      %v511 = vld [vmem:[%s501 + $0x48] sm:$0xff]
      %v512 = vld [vmem:[%s501 + $0x50] sm:$0xff]
      %v513 = vld [vmem:[%s501 + $0x58] sm:$0xff]
      %v526 = vunpack.c.l.b16 %v502
      %v527 = vunpack.c.h.b16 %v502
      %v528 = vunpack.c.l.b16 %v503
      %v529 = vunpack.c.h.b16 %v503
      %v530 = vunpack.c.l.b16 %v504
      %v531 = vunpack.c.h.b16 %v504
      %v532 = vunpack.c.l.b16 %v505
      %v533 = vunpack.c.h.b16 %v505
      %v534 = vunpack.c.l.b16 %v506
      %v535 = vunpack.c.h.b16 %v506
      %v536 = vunpack.c.l.b16 %v507
      %v537 = vunpack.c.h.b16 %v507
      %v538 = vunpack.c.l.b16 %v508
      %v539 = vunpack.c.h.b16 %v508
      %v540 = vunpack.c.l.b16 %v509
      %v541 = vunpack.c.h.b16 %v509
      %v542 = vunpack.c.l.b16 %v510
      %v543 = vunpack.c.h.b16 %v510
      %v544 = vunpack.c.l.b16 %v511
      %v545 = vunpack.c.h.b16 %v511
      %v546 = vunpack.c.l.b16 %v512
      %v547 = vunpack.c.h.b16 %v512
      %v548 = vunpack.c.l.b16 %v513
      %v549 = vunpack.c.h.b16 %v513
      %v550 = vpack.c.b16 %v528, %v526
      %v551 = vpack.c.b16 %v529, %v527
      %v552 = vpack.c.b16 %v532, %v530
      %v553 = vpack.c.b16 %v533, %v531
      %v554 = vpack.c.b16 %v536, %v534
      %v555 = vpack.c.b16 %v537, %v535
      %v556 = vpack.c.b16 %v540, %v538
      %v557 = vpack.c.b16 %v541, %v539
      %v558 = vpack.c.b16 %v544, %v542
      %v559 = vpack.c.b16 %v545, %v543
      %v560 = vpack.c.b16 %v548, %v546
      %v561 = vpack.c.b16 %v549, %v547
      %574 = vmatprep.subr.bf16.mxu0 %v551
      %575 = vmatpush1.bf16.msra.mxu0 %v550
      %576 = vmatprep.subr.bf16.mxu0 %v553
      %577 = vmatpush1.bf16.msra.mxu0 %v552
      %578 = vmatprep.subr.bf16.mxu0 %v555
      %579 = vmatpush1.bf16.msra.mxu0 %v554
      %580 = vmatprep.subr.bf16.mxu0 %v557
      %581 = vmatpush1.bf16.msra.mxu0 %v556
      %582 = vmatprep.subr.bf16.mxu0 %v559
      %583 = vmatpush1.bf16.msra.mxu0 %v558
      %584 = vmatprep.subr.bf16.mxu0 %v561
      %585 = vmatpush1.bf16.msra.mxu0 %v560
      %586 = vmatprep.subr.bf16.mxu0 0
      %587 = vmatpush1.bf16.msra.mxu0 0
      %588 = vmatprep.subr.bf16.mxu0 0
      %589 = vmatpush1.bf16.msra.mxu0 0
      %590 = vmatprep.subr.bf16.mxu0 0
      %591 = vmatpush1.bf16.msra.mxu0 0
      %592 = vmatprep.subr.bf16.mxu0 0
      %593 = vmatpush1.bf16.msra.mxu0 0
      %594 = vmatprep.subr.bf16.mxu0 0
      %595 = vmatpush1.bf16.msra.mxu0 0
      %596 = vmatprep.subr.bf16.mxu0 0
      %597 = vmatpush1.bf16.msra.mxu0 0
      %598 = vmatprep.subr.bf16.mxu0 0
      %599 = vmatpush1.bf16.msra.mxu0 0
      %600 = vmatprep.subr.bf16.mxu0 0
      %601 = vmatpush1.bf16.msra.mxu0 0
      %602 = vmatprep.subr.bf16.mxu0 0
      %603 = vmatpush1.bf16.msra.mxu0 0
      %604 = vmatprep.subr.bf16.mxu0 0
      %605 = vmatpush1.bf16.msra.mxu0 0
      %606 = vmatprep.mubr.bf16.mxu0 0
      %607 = vmatmul.mubr.bf16.gmra.mrb[0].mxu0 %v265
      %v608 = vpop.f32.mrb[0].mxu0
      %v609 = vadd.f32 0.0, %v608
      %v610 = vpop.f32.mrb[0].mxu0
      %v611 = vadd.f32 0.0, %v610
      %v612 = vpop.f32.mrb[0].mxu0
      %v613 = vadd.f32 0.0, %v612
      %v614 = vpop.f32.mrb[0].mxu0
      %v615 = vadd.f32 0.0, %v614
      %616 = vmatprep.mubr.bf16.mxu0 0
      %617 = vmatmul.mubr.bf16.gmra.mrb[0].mxu0 %v268
      %v618 = vpop.f32.mrb[0].mxu0
      %v619 = vadd.f32 0.0, %v618
      %v620 = vpop.f32.mrb[0].mxu0
      %v621 = vadd.f32 0.0, %v620
      %v622 = vpop.f32.mrb[0].mxu0
      %v623 = vadd.f32 0.0, %v622
      %v624 = vpop.f32.mrb[0].mxu0
      %v625 = vadd.f32 0.0, %v624
      %626 = vdwg.mxu0
      %v627 = vld [vmem:[#allocation2] sm:$0xff]
      %v628 = vld [vmem:[#allocation2 + $0x8] sm:$0xff]
      %v629 = vld [vmem:[#allocation2 + $0x10] sm:$0xff]
      %v630 = vld [vmem:[#allocation2 + $0x18] sm:$0xff]
      %v631 = vld [vmem:[#allocation2 + $0x20] sm:$0xff]
      %v632 = vld [vmem:[#allocation2 + $0x28] sm:$0xff]
      %v633 = vld [vmem:[#allocation2 + $0x30] sm:$0xff]
      %v634 = vld [vmem:[#allocation2 + $0x38] sm:$0xff]
      %v635 = vrot.slane %v609, 2
      %v636 = vrot.slane %v611, 2
      %v637 = vrot.slane %v613, 2
      %v638 = vrot.slane %v615, 2
      %v639 = vrot.slane %v619, 2
      %v640 = vrot.slane %v621, 2
      %v641 = vrot.slane %v623, 2
      %v642 = vrot.slane %v625, 2
      %vm643 = vcmp.lt.s32.totalorder %v475, 6
      %v644 = vsel %vm643, %v639, %v641
      %v645 = vsel %vm643, %v640, %v642
      %v646 = vsel %vm643, %v637, %v639
      %v647 = vsel %vm643, %v638, %v640
      %v648 = vsel %vm643, %v635, %v637
      %v649 = vsel %vm643, %v636, %v638
      %v650 = vsel %vm643, %v641, %v635
      %v651 = vsel %vm643, %v642, %v636
      %v652 = vadd.f32 %v627, %v648
      %v653 = vadd.f32 %v628, %v649
      %v654 = vadd.f32 %v629, %v646
      %v655 = vadd.f32 %v630, %v647
      %v656 = vadd.f32 %v631, %v644
      %v657 = vadd.f32 %v632, %v645
      %v658 = vadd.f32 %v633, %v650
      %v659 = vadd.f32 %v634, %v651
      %660 = vst [vmem:[#allocation2] sm:$0xff] %v652
      %661 = vst.msk [vmem:[#allocation2 + $0x8] sm:$0xff] %vm324, %v653
      %662 = vst [vmem:[#allocation2 + $0x10] sm:$0xff] %v654
      %663 = vst.msk [vmem:[#allocation2 + $0x18] sm:$0xff] %vm324, %v655
      %664 = vst [vmem:[#allocation2 + $0x20] sm:$0xff] %v656
      %665 = vst.msk [vmem:[#allocation2 + $0x28] sm:$0xff] %vm324, %v657
      %666 = vst [vmem:[#allocation2 + $0x30] sm:$0xff] %v658
      %667 = vst.msk [vmem:[#allocation2 + $0x38] sm:$0xff] %vm324, %v659
      %s668 = scalar_lea.vmem %s1, 288
      %v669 = vld [vmem:[%s668] sm:$0xff]
      %v670 = vld [vmem:[%s668 + $0x8] sm:$0xff]
      %v671 = vld [vmem:[%s668 + $0x10] sm:$0xff]
      %v672 = vld [vmem:[%s668 + $0x18] sm:$0xff]
      %v673 = vld [vmem:[%s668 + $0x20] sm:$0xff]
      %v674 = vld [vmem:[%s668 + $0x28] sm:$0xff]
      %v675 = vld [vmem:[%s668 + $0x30] sm:$0xff]
      %v676 = vld [vmem:[%s668 + $0x38] sm:$0xff]
      %v677 = vld [vmem:[%s668 + $0x40] sm:$0xff]
      %v678 = vld [vmem:[%s668 + $0x48] sm:$0xff]
      %v679 = vld [vmem:[%s668 + $0x50] sm:$0xff]
      %v680 = vld [vmem:[%s668 + $0x58] sm:$0xff]
      %v693 = vunpack.c.l.b16 %v669
      %v694 = vunpack.c.h.b16 %v669
      %v695 = vunpack.c.l.b16 %v670
      %v696 = vunpack.c.h.b16 %v670
      %v697 = vunpack.c.l.b16 %v671
      %v698 = vunpack.c.h.b16 %v671
      %v699 = vunpack.c.l.b16 %v672
      %v700 = vunpack.c.h.b16 %v672
      %v701 = vunpack.c.l.b16 %v673
      %v702 = vunpack.c.h.b16 %v673
      %v703 = vunpack.c.l.b16 %v674
      %v704 = vunpack.c.h.b16 %v674
      %v705 = vunpack.c.l.b16 %v675
      %v706 = vunpack.c.h.b16 %v675
      %v707 = vunpack.c.l.b16 %v676
      %v708 = vunpack.c.h.b16 %v676
      %v709 = vunpack.c.l.b16 %v677
      %v710 = vunpack.c.h.b16 %v677
      %v711 = vunpack.c.l.b16 %v678
      %v712 = vunpack.c.h.b16 %v678
      %v713 = vunpack.c.l.b16 %v679
      %v714 = vunpack.c.h.b16 %v679
      %v715 = vunpack.c.l.b16 %v680
      %v716 = vunpack.c.h.b16 %v680
      %v717 = vpack.c.b16 %v695, %v693
      %v718 = vpack.c.b16 %v696, %v694
      %v719 = vpack.c.b16 %v699, %v697
      %v720 = vpack.c.b16 %v700, %v698
      %v721 = vpack.c.b16 %v703, %v701
      %v722 = vpack.c.b16 %v704, %v702
      %v723 = vpack.c.b16 %v707, %v705
      %v724 = vpack.c.b16 %v708, %v706
      %v725 = vpack.c.b16 %v711, %v709
      %v726 = vpack.c.b16 %v712, %v710
      %v727 = vpack.c.b16 %v715, %v713
      %v728 = vpack.c.b16 %v716, %v714
      %741 = vmatprep.subr.bf16.mxu0 %v718
      %742 = vmatpush1.bf16.msra.mxu0 %v717
      %743 = vmatprep.subr.bf16.mxu0 %v720
      %744 = vmatpush1.bf16.msra.mxu0 %v719
      %745 = vmatprep.subr.bf16.mxu0 %v722
      %746 = vmatpush1.bf16.msra.mxu0 %v721
      %747 = vmatprep.subr.bf16.mxu0 %v724
      %748 = vmatpush1.bf16.msra.mxu0 %v723
      %749 = vmatprep.subr.bf16.mxu0 %v726
      %750 = vmatpush1.bf16.msra.mxu0 %v725
      %751 = vmatprep.subr.bf16.mxu0 %v728
      %752 = vmatpush1.bf16.msra.mxu0 %v727
      %753 = vmatprep.subr.bf16.mxu0 0
      %754 = vmatpush1.bf16.msra.mxu0 0
      %755 = vmatprep.subr.bf16.mxu0 0
      %756 = vmatpush1.bf16.msra.mxu0 0
      %757 = vmatprep.subr.bf16.mxu0 0
      %758 = vmatpush1.bf16.msra.mxu0 0
      %759 = vmatprep.subr.bf16.mxu0 0
      %760 = vmatpush1.bf16.msra.mxu0 0
      %761 = vmatprep.subr.bf16.mxu0 0
      %762 = vmatpush1.bf16.msra.mxu0 0
      %763 = vmatprep.subr.bf16.mxu0 0
      %764 = vmatpush1.bf16.msra.mxu0 0
      %765 = vmatprep.subr.bf16.mxu0 0
      %766 = vmatpush1.bf16.msra.mxu0 0
      %767 = vmatprep.subr.bf16.mxu0 0
      %768 = vmatpush1.bf16.msra.mxu0 0
      %769 = vmatprep.subr.bf16.mxu0 0
      %770 = vmatpush1.bf16.msra.mxu0 0
      %771 = vmatprep.subr.bf16.mxu0 0
      %772 = vmatpush1.bf16.msra.mxu0 0
      %773 = vmatprep.mubr.bf16.mxu0 0
      %774 = vmatmul.mubr.bf16.gmra.mrb[0].mxu0 %v265
      %v775 = vpop.f32.mrb[0].mxu0
      %v776 = vadd.f32 0.0, %v775
      %v777 = vpop.f32.mrb[0].mxu0
      %v778 = vadd.f32 0.0, %v777
      %v779 = vpop.f32.mrb[0].mxu0
      %v780 = vadd.f32 0.0, %v779
      %v781 = vpop.f32.mrb[0].mxu0
      %v782 = vadd.f32 0.0, %v781
      %783 = vmatprep.mubr.bf16.mxu0 0
      %784 = vmatmul.mubr.bf16.gmra.mrb[0].mxu0 %v268
      %v785 = vpop.f32.mrb[0].mxu0
      %v786 = vadd.f32 0.0, %v785
      %v787 = vpop.f32.mrb[0].mxu0
      %v788 = vadd.f32 0.0, %v787
      %v789 = vpop.f32.mrb[0].mxu0
      %v790 = vadd.f32 0.0, %v789
      %v791 = vpop.f32.mrb[0].mxu0
      %v792 = vadd.f32 0.0, %v791
      %793 = vdwg.mxu0
      %v794 = vld [vmem:[#allocation2] sm:$0xff]
      %v795 = vld [vmem:[#allocation2 + $0x8] sm:$0xff]
      %v796 = vld [vmem:[#allocation2 + $0x10] sm:$0xff]
      %v797 = vld [vmem:[#allocation2 + $0x18] sm:$0xff]
      %v798 = vld [vmem:[#allocation2 + $0x20] sm:$0xff]
      %v799 = vld [vmem:[#allocation2 + $0x28] sm:$0xff]
      %v800 = vld [vmem:[#allocation2 + $0x30] sm:$0xff]
      %v801 = vld [vmem:[#allocation2 + $0x38] sm:$0xff]
      %v802 = vrot.slane %v776, 3
      %v803 = vrot.slane %v778, 3
      %v804 = vrot.slane %v780, 3
      %v805 = vrot.slane %v782, 3
      %v806 = vrot.slane %v786, 3
      %v807 = vrot.slane %v788, 3
      %v808 = vrot.slane %v790, 3
      %v809 = vrot.slane %v792, 3
      %vm810 = vcmp.lt.s32.totalorder %v475, 5
      %v811 = vsel %vm810, %v806, %v808
      %v812 = vsel %vm810, %v807, %v809
      %v813 = vsel %vm810, %v804, %v806
      %v814 = vsel %vm810, %v805, %v807
      %v815 = vsel %vm810, %v802, %v804
      %v816 = vsel %vm810, %v803, %v805
      %v817 = vsel %vm810, %v808, %v802
      %v818 = vsel %vm810, %v809, %v803
      %v819 = vadd.f32 %v794, %v815
      %v820 = vadd.f32 %v795, %v816
      %v821 = vadd.f32 %v796, %v813
      %v822 = vadd.f32 %v797, %v814
      %v823 = vadd.f32 %v798, %v811
      %v824 = vadd.f32 %v799, %v812
      %v825 = vadd.f32 %v800, %v817
      %v826 = vadd.f32 %v801, %v818
      %827 = vst [vmem:[#allocation2] sm:$0xff] %v819
      %828 = vst.msk [vmem:[#allocation2 + $0x8] sm:$0xff] %vm324, %v820
      %829 = vst [vmem:[#allocation2 + $0x10] sm:$0xff] %v821
      %830 = vst.msk [vmem:[#allocation2 + $0x18] sm:$0xff] %vm324, %v822
      %831 = vst [vmem:[#allocation2 + $0x20] sm:$0xff] %v823
      %832 = vst.msk [vmem:[#allocation2 + $0x28] sm:$0xff] %vm324, %v824
      %833 = vst [vmem:[#allocation2 + $0x30] sm:$0xff] %v825
      %834 = vst.msk [vmem:[#allocation2 + $0x38] sm:$0xff] %vm324, %v826
      %s835 = scalar_lea.vmem %s1, 384
      %v836 = vld [vmem:[%s835] sm:$0xff]
      %v837 = vld [vmem:[%s835 + $0x8] sm:$0xff]
      %v838 = vld [vmem:[%s835 + $0x10] sm:$0xff]
      %v839 = vld [vmem:[%s835 + $0x18] sm:$0xff]
      %v840 = vld [vmem:[%s835 + $0x20] sm:$0xff]
      %v841 = vld [vmem:[%s835 + $0x28] sm:$0xff]
      %v842 = vld [vmem:[%s835 + $0x30] sm:$0xff]
      %v843 = vld [vmem:[%s835 + $0x38] sm:$0xff]
      %v844 = vld [vmem:[%s835 + $0x40] sm:$0xff]
      %v845 = vld [vmem:[%s835 + $0x48] sm:$0xff]
      %v846 = vld [vmem:[%s835 + $0x50] sm:$0xff]
      %v847 = vld [vmem:[%s835 + $0x58] sm:$0xff]
      %v860 = vunpack.c.l.b16 %v836
      %v861 = vunpack.c.h.b16 %v836
      %v862 = vunpack.c.l.b16 %v837
      %v863 = vunpack.c.h.b16 %v837
      %v864 = vunpack.c.l.b16 %v838
      %v865 = vunpack.c.h.b16 %v838
      %v866 = vunpack.c.l.b16 %v839
      %v867 = vunpack.c.h.b16 %v839
      %v868 = vunpack.c.l.b16 %v840
      %v869 = vunpack.c.h.b16 %v840
      %v870 = vunpack.c.l.b16 %v841
      %v871 = vunpack.c.h.b16 %v841
      %v872 = vunpack.c.l.b16 %v842
      %v873 = vunpack.c.h.b16 %v842
      %v874 = vunpack.c.l.b16 %v843
      %v875 = vunpack.c.h.b16 %v843
      %v876 = vunpack.c.l.b16 %v844
      %v877 = vunpack.c.h.b16 %v844
      %v878 = vunpack.c.l.b16 %v845
      %v879 = vunpack.c.h.b16 %v845
      %v880 = vunpack.c.l.b16 %v846
      %v881 = vunpack.c.h.b16 %v846
      %v882 = vunpack.c.l.b16 %v847
      %v883 = vunpack.c.h.b16 %v847
      %v884 = vpack.c.b16 %v862, %v860
      %v885 = vpack.c.b16 %v863, %v861
      %v886 = vpack.c.b16 %v866, %v864
      %v887 = vpack.c.b16 %v867, %v865
      %v888 = vpack.c.b16 %v870, %v868
      %v889 = vpack.c.b16 %v871, %v869
      %v890 = vpack.c.b16 %v874, %v872
      %v891 = vpack.c.b16 %v875, %v873
      %v892 = vpack.c.b16 %v878, %v876
      %v893 = vpack.c.b16 %v879, %v877
      %v894 = vpack.c.b16 %v882, %v880
      %v895 = vpack.c.b16 %v883, %v881
      %908 = vmatprep.subr.bf16.mxu0 %v885
      %909 = vmatpush1.bf16.msra.mxu0 %v884
      %910 = vmatprep.subr.bf16.mxu0 %v887
      %911 = vmatpush1.bf16.msra.mxu0 %v886
      %912 = vmatprep.subr.bf16.mxu0 %v889
      %913 = vmatpush1.bf16.msra.mxu0 %v888
      %914 = vmatprep.subr.bf16.mxu0 %v891
      %915 = vmatpush1.bf16.msra.mxu0 %v890
      %916 = vmatprep.subr.bf16.mxu0 %v893
      %917 = vmatpush1.bf16.msra.mxu0 %v892
      %918 = vmatprep.subr.bf16.mxu0 %v895
      %919 = vmatpush1.bf16.msra.mxu0 %v894
      %920 = vmatprep.subr.bf16.mxu0 0
      %921 = vmatpush1.bf16.msra.mxu0 0
      %922 = vmatprep.subr.bf16.mxu0 0
      %923 = vmatpush1.bf16.msra.mxu0 0
      %924 = vmatprep.subr.bf16.mxu0 0
      %925 = vmatpush1.bf16.msra.mxu0 0
      %926 = vmatprep.subr.bf16.mxu0 0
      %927 = vmatpush1.bf16.msra.mxu0 0
      %928 = vmatprep.subr.bf16.mxu0 0
      %929 = vmatpush1.bf16.msra.mxu0 0
      %930 = vmatprep.subr.bf16.mxu0 0
      %931 = vmatpush1.bf16.msra.mxu0 0
      %932 = vmatprep.subr.bf16.mxu0 0
      %933 = vmatpush1.bf16.msra.mxu0 0
      %934 = vmatprep.subr.bf16.mxu0 0
      %935 = vmatpush1.bf16.msra.mxu0 0
      %936 = vmatprep.subr.bf16.mxu0 0
      %937 = vmatpush1.bf16.msra.mxu0 0
      %938 = vmatprep.subr.bf16.mxu0 0
      %939 = vmatpush1.bf16.msra.mxu0 0
      %940 = vmatprep.mubr.bf16.mxu0 0
      %941 = vmatmul.mubr.bf16.gmra.mrb[0].mxu0 %v265
      %v942 = vpop.f32.mrb[0].mxu0
      %v943 = vadd.f32 0.0, %v942
      %v944 = vpop.f32.mrb[0].mxu0
      %v945 = vadd.f32 0.0, %v944
      %v946 = vpop.f32.mrb[0].mxu0
      %v947 = vadd.f32 0.0, %v946
      %v948 = vpop.f32.mrb[0].mxu0
      %v949 = vadd.f32 0.0, %v948
      %950 = vmatprep.mubr.bf16.mxu0 0
      %951 = vmatmul.mubr.bf16.gmra.mrb[0].mxu0 %v268
      %v952 = vpop.f32.mrb[0].mxu0
      %v953 = vadd.f32 0.0, %v952
      %v954 = vpop.f32.mrb[0].mxu0
      %v955 = vadd.f32 0.0, %v954
      %v956 = vpop.f32.mrb[0].mxu0
      %v957 = vadd.f32 0.0, %v956
      %v958 = vpop.f32.mrb[0].mxu0
      %v959 = vadd.f32 0.0, %v958
      %960 = vdwg.mxu0
      %v961 = vld [vmem:[#allocation2] sm:$0xff]
      %v962 = vld [vmem:[#allocation2 + $0x8] sm:$0xff]
      %v963 = vld [vmem:[#allocation2 + $0x10] sm:$0xff]
      %v964 = vld [vmem:[#allocation2 + $0x18] sm:$0xff]
      %v965 = vld [vmem:[#allocation2 + $0x20] sm:$0xff]
      %v966 = vld [vmem:[#allocation2 + $0x28] sm:$0xff]
      %v967 = vld [vmem:[#allocation2 + $0x30] sm:$0xff]
      %v968 = vld [vmem:[#allocation2 + $0x38] sm:$0xff]
      %v969 = vrot.slane %v943, 4
      %v970 = vrot.slane %v945, 4
      %v971 = vrot.slane %v947, 4
      %v972 = vrot.slane %v949, 4
      %v973 = vrot.slane %v953, 4
      %v974 = vrot.slane %v955, 4
      %v975 = vrot.slane %v957, 4
      %v976 = vrot.slane %v959, 4
      %vm977 = vcmp.lt.s32.totalorder %v475, 4
      %v978 = vsel %vm977, %v973, %v975
      %v979 = vsel %vm977, %v974, %v976
      %v980 = vsel %vm977, %v971, %v973
      %v981 = vsel %vm977, %v972, %v974
      %v982 = vsel %vm977, %v969, %v971
      %v983 = vsel %vm977, %v970, %v972
      %v984 = vsel %vm977, %v975, %v969
      %v985 = vsel %vm977, %v976, %v970
      %v986 = vadd.f32 %v961, %v982
      %v987 = vadd.f32 %v962, %v983
      %v988 = vadd.f32 %v963, %v980
      %v989 = vadd.f32 %v964, %v981
      %v990 = vadd.f32 %v965, %v978
      %v991 = vadd.f32 %v966, %v979
      %v992 = vadd.f32 %v967, %v984
      %v993 = vadd.f32 %v968, %v985
      %994 = vst [vmem:[#allocation2] sm:$0xff] %v986
      %995 = vst.msk [vmem:[#allocation2 + $0x8] sm:$0xff] %vm324, %v987
      %996 = vst [vmem:[#allocation2 + $0x10] sm:$0xff] %v988
      %997 = vst.msk [vmem:[#allocation2 + $0x18] sm:$0xff] %vm324, %v989
      %998 = vst [vmem:[#allocation2 + $0x20] sm:$0xff] %v990
      %999 = vst.msk [vmem:[#allocation2 + $0x28] sm:$0xff] %vm324, %v991
      %1000 = vst [vmem:[#allocation2 + $0x30] sm:$0xff] %v992
      %1001 = vst.msk [vmem:[#allocation2 + $0x38] sm:$0xff] %vm324, %v993
      %v1002 = vld [vmem:[#allocation2] sm:$0xff]
      %v1003 = vld [vmem:[#allocation2 + $0x8] sm:$0xff]
      %v1004 = vld [vmem:[#allocation2 + $0x10] sm:$0xff]
      %v1005 = vld [vmem:[#allocation2 + $0x18] sm:$0xff]
      %v1006 = vld [vmem:[#allocation2 + $0x20] sm:$0xff]
      %v1007 = vld [vmem:[#allocation2 + $0x28] sm:$0xff]
      %v1008 = vld [vmem:[#allocation2 + $0x30] sm:$0xff]
      %v1009 = vld [vmem:[#allocation2 + $0x38] sm:$0xff]
      %v1010 = vld [vmem:[%s2] sm:$0x3]
      %v1012 = vlaneseq
      %v1013 = vshrl.u32 %v1012, 7
      %v1014 = vsub.s32 0, %v1013
      %v1015 = vrot.slane %v1010, %v1014
      %v1016 = vlaneseq
      %v1017 = vshrl.u32 %v1016, 7
      %v1018 = vsub.s32 1, %v1017
      %v1019 = vrot.slane %v1010, %v1018
      %v1022 = vadd.f32 %v1002, %v1015
      %v1023 = vadd.f32 %v1003, %v1019
      %v1024 = vadd.f32 %v1004, %v1015
      %v1025 = vadd.f32 %v1005, %v1019
      %v1026 = vadd.f32 %v1006, %v1015
      %v1027 = vadd.f32 %v1007, %v1019
      %v1028 = vadd.f32 %v1008, %v1015
      %v1029 = vadd.f32 %v1009, %v1019
      %v1030 = vmax.f32 %v1022, 0.0
      %v1031 = vmax.f32 %v1023, 0.0
      %v1032 = vmax.f32 %v1024, 0.0
      %v1033 = vmax.f32 %v1025, 0.0
      %v1034 = vmax.f32 %v1026, 0.0
      %v1035 = vmax.f32 %v1027, 0.0
      %v1036 = vmax.f32 %v1028, 0.0
      %v1037 = vmax.f32 %v1029, 0.0
      %v1038 = vpack.c.bf16 %v1032, %v1030
      %v1039 = vpack.c.bf16 %v1033, %v1031
      %v1040 = vpack.c.bf16 %v1036, %v1034
      %v1041 = vpack.c.bf16 %v1037, %v1035
      %v1046 = vunpack.c.l.b16 %v1038
      %v1047 = vunpack.c.l.b16 %v1039
      %v1048 = vunpack.c.h.b16 %v1038
      %v1049 = vunpack.c.h.b16 %v1039
      %v1050 = vunpack.c.l.b16 %v1040
      %v1051 = vunpack.c.l.b16 %v1041
      %v1052 = vunpack.c.h.b16 %v1040
      %v1053 = vunpack.c.h.b16 %v1041
      %v1054 = vpack.c.b16 %v1047, %v1046
      %v1055 = vpack.c.b16 %v1049, %v1048
      %v1056 = vpack.c.b16 %v1051, %v1050
      %v1057 = vpack.c.b16 %v1053, %v1052
      %vm1062 = vcmask 1043456
      %vm1063 = vcmask 326660
      %vm1064 = vmor %vm1063, %vm1062
      %1065 = vst.msk [vmem:[%s174] sm:$0xff] %vm1064, %v1054
      %1066 = vst.msk [vmem:[%s174 + $0x8] sm:$0xff] %vm1064, %v1055
      %1067 = vst.msk [vmem:[%s174 + $0x10] sm:$0xff] %vm1064, %v1056
      %1068 = vst.msk [vmem:[%s174 + $0x18] sm:$0xff] %vm1064, %v1057
      %s1069 = smul.u32 4, %s14
      %p1070 = scmp.lt.s32.totalorder %s1069, 15
      %s1071 = scalar_select %p1070, %s1069, 15
      %s1072 = smul.addr %s1071, 2
      %s1073 = smul.addr %s1072, 4
      %s1074 = scalar_lea.vmem %s3, %s1073
      // Predicated region
      $region33: #{net_forward.3} parent=31 // pred_check
        %p1075 = pneg %p100
      $region34: #{net_forward.3} parent=31 // pred_check_branch
        %1077 = sbr.rel (%p1075) target = $region36
      $region35: #{net_forward.3} parent=31 // pred_region
        %s1078 = smul.u32 4, %s14
      $region36: #{net_forward.3} parent=31 // pred_fallthru
        _
    $region32: #{net_forward.3} parent=5 // pred_fallthru
      _
    %p1079 = scmp.le.s32.totalorder 2, %s9
    // Predicated region
    $region37: #{net_forward.3} parent=5 // pred_check
      %p1080 = pneg %p1079
    $region38: #{net_forward.3} parent=5 // pred_check_branch
      %1082 = sbr.rel (%p1080) target = $region40
    $region39: #{net_forward.3} parent=5 // pred_region
      %s1083 = ssub.s32 %s9, 2
      // Predicated region
      $region41: #{net_forward.3} parent=39 // pred_check
        %p1084 = pneg %p106
      $region42: #{net_forward.3} parent=39 // pred_check_branch
        %1086 = sbr.rel (%p1084) target = $region44
      $region43: #{net_forward.3} parent=39 // pred_region
        %s1087 = smul.u32 4, %s15
        %p1088 = scmp.lt.s32.totalorder %s1087, 15
        %s1089 = scalar_select %p1088, %s1087, 15
        %s1090 = smul.addr %s1089, 2
        %s1091 = smul.addr %s1090, 4
        %s1092 = scalar_lea.vmem %s3, %s1091
      $region44: #{net_forward.3} parent=39 // pred_fallthru
        _
    $region40: #{net_forward.3} parent=5 // pred_fallthru
      _
  $region6: #{net_forward.3} parent=0 // loop_footer
    %s13 = sadd.s32 1, %s9
  $region7: #{net_forward.3} parent=0 // loop_footer_branch
    %8 = sbr.rel target = $region3
  $region8: #{net_forward.3} parent=0 // loop_exit
    _

// kernel: net_forward.4
$region0: #{net_forward.4}
  #allocation0 [shape = 'u32[]', space=smem, size = 0x4, offset = 0x4, fixed_abs, tag = 'smem constant byte address 0x4 - core index']
  #allocation1 [shape = 'u32[144,128]{1,0:T(1,128)}', space=vmem, size = 0x12000, scoped, tag = 'internal scratch']
  #allocation2 [shape = 'f32[16,160]{1,0:T(8,128)}', space=vmem, size = 0x4000, scoped, tag = 'scratch operand']
  %s0 = inlined_call_operand.vmem [shape: bf16[64,84], index: 0, kind: input, shape index: {}]
  %s1 = inlined_call_operand.vmem [shape: bf16[5,84,160], index: 1, kind: input, shape index: {}]
  %s2 = inlined_call_operand.vmem [shape: f32[1,160], index: 2, kind: input, shape index: {}]
  %s3 = inlined_call_operand.vmem [shape: bf16[64,160], index: 3, kind: output, shape index: {}]
  %s4 = sld [smem:[#allocation0]]
  $region45: #{net_forward.4} parent=0
    _
  %s6 = ssub.s32 1, %s4
  %s7 = scalar_select 0, %s6, %s4
  loop: start=0, step=1, limit=6
  $region2: #{net_forward.4} parent=0 // loop_pre_header
    _
  $region3: #{net_forward.4} parent=0 // loop_header
    %s9 = sphi 0, %s13
    %p10 = scmp.ge.s32.totalorder %s9, 6
    %s19 = sphi 0, %s21
    %s22 = sphi 0, %s19
    %s23 = sphi 0, %s22
    %s39 = sphi 0, %s23
    %s43 = sphi 0, %s43
    %s45 = sphi 0, %s43
    %s46 = sphi 0, %s45
    %s60 = sphi 0, %s46
    %s64 = sphi 0, %s64
    %s66 = sphi 0, %s64
    %s67 = sphi 0, %s66
    %s81 = sphi 0, %s67
    %s87 = sphi 0, %s89
    %s90 = sphi 0, %s87
    %s91 = sphi 0, %s90
    %s107 = sphi 0, %s91
  $region4: #{net_forward.4} parent=0 // loop_header_branch
    %12 = sbr.rel (%p10) target = $region8
  $region5: #{net_forward.4} parent=0 // loop_body
    %s14 = ssub.s32 %s9, 1
    %s15 = ssub.s32 %s9, 2
    %s16 = sadd.s32 %s9, 1
    %s17 = ssub.s32 %s9, %s16
    %p18 = scmp.eq.s32.totalorder %s17, 0
    %s20 = sadd.s32 %s19, 1
    %s21 = scalar_select %p18, %s19, %s20
    %p24 = pneg %p18
    %p25 = scmp.eq.s32.totalorder %s9, 3
    %p26 = por %p24, %p25
    %p27 = scmp.ne.s32.totalorder %s19, %s22
    %p28 = scmp.eq.s32.totalorder %s9, 0
    %p29 = por %p27, %p28
    %p30 = scmp.ne.s32.totalorder %s19, %s22
    %p31 = scmp.eq.s32.totalorder %s14, 3
    %p32 = por %p30, %p31
    %p33 = scmp.ne.s32.totalorder %s22, %s23
    %p34 = scmp.eq.s32.totalorder %s14, 0
    %p35 = por %p33, %p34
    %p36 = scmp.ne.s32.totalorder %s22, %s23
    %p37 = scmp.eq.s32.totalorder %s15, 3
    %p38 = por %p36, %p37
    %p40 = scmp.ne.s32.totalorder %s23, %s39
    %p41 = scmp.eq.s32.totalorder %s15, 0
    %p42 = por %p40, %p41
    %s44 = sadd.s32 %s43, 1
    %p47 = scmp.eq.s32.totalorder %s9, 3
    %p48 = scmp.ne.s32.totalorder %s43, %s45
    %p49 = scmp.eq.s32.totalorder %s9, 0
    %p50 = por %p48, %p49
    %p51 = scmp.ne.s32.totalorder %s43, %s45
    %p52 = scmp.eq.s32.totalorder %s14, 3
    %p53 = por %p51, %p52
    %p54 = scmp.ne.s32.totalorder %s45, %s46
    %p55 = scmp.eq.s32.totalorder %s14, 0
    %p56 = por %p54, %p55
    %p57 = scmp.ne.s32.totalorder %s45, %s46
    %p58 = scmp.eq.s32.totalorder %s15, 3
    %p59 = por %p57, %p58
    %p61 = scmp.ne.s32.totalorder %s46, %s60
    %p62 = scmp.eq.s32.totalorder %s15, 0
    %p63 = por %p61, %p62
    %s65 = sadd.s32 %s64, 1
    %p68 = scmp.eq.s32.totalorder %s9, 3
    %p69 = scmp.ne.s32.totalorder %s64, %s66
    %p70 = scmp.eq.s32.totalorder %s9, 0
    %p71 = por %p69, %p70
    %p72 = scmp.ne.s32.totalorder %s64, %s66
    %p73 = scmp.eq.s32.totalorder %s14, 3
    %p74 = por %p72, %p73
    %p75 = scmp.ne.s32.totalorder %s66, %s67
    %p76 = scmp.eq.s32.totalorder %s14, 0
    %p77 = por %p75, %p76
    %p78 = scmp.ne.s32.totalorder %s66, %s67
    %p79 = scmp.eq.s32.totalorder %s15, 3
    %p80 = por %p78, %p79
    %p82 = scmp.ne.s32.totalorder %s67, %s81
    %p83 = scmp.eq.s32.totalorder %s15, 0
    %p84 = por %p82, %p83
    %s85 = ssub.s32 %s9, %s16
    %p86 = scmp.eq.s32.totalorder %s85, 0
    %s88 = sadd.s32 %s87, 1
    %s89 = scalar_select %p86, %s87, %s88
    %p92 = pneg %p86
    %p93 = scmp.eq.s32.totalorder %s9, 3
    %p94 = por %p92, %p93
    %p95 = scmp.ne.s32.totalorder %s87, %s90
    %p96 = scmp.eq.s32.totalorder %s9, 0
    %p97 = por %p95, %p96
    %p98 = scmp.ne.s32.totalorder %s87, %s90
    %p99 = scmp.eq.s32.totalorder %s14, 3
    %p100 = por %p98, %p99
    %p101 = scmp.ne.s32.totalorder %s90, %s91
    %p102 = scmp.eq.s32.totalorder %s14, 0
    %p103 = por %p101, %p102
    %p104 = scmp.ne.s32.totalorder %s90, %s91
    %p105 = scmp.eq.s32.totalorder %s15, 3
    %p106 = por %p104, %p105
    %p108 = scmp.ne.s32.totalorder %s91, %s107
    %p109 = scmp.eq.s32.totalorder %s15, 0
    %p110 = por %p108, %p109
    %p111 = scmp.le.s32.totalorder 1, %s9
    %p112 = scmp.lt.s32.totalorder %s9, 5
    %p113 = pnand %p111, %p112
    %p114 = pneg %p113
    // Predicated region
    $region9: #{net_forward.4} parent=5 // pred_check
      _
    $region10: #{net_forward.4} parent=5 // pred_check_branch
      %116 = sbr.rel (%p113) target = $region12
    $region11: #{net_forward.4} parent=5 // pred_region
      %s117 = ssub.s32 %s9, 1
      // Predicated region
      $region13: #{net_forward.4} parent=11 // pred_check
        %p118 = pneg %p56
      $region14: #{net_forward.4} parent=11 // pred_check_branch
        %120 = sbr.rel (%p118) target = $region16
      $region15: #{net_forward.4} parent=11 // pred_region
        _
      $region16: #{net_forward.4} parent=11 // pred_fallthru
        _
      // Predicated region
      $region17: #{net_forward.4} parent=11 // pred_check
        %p121 = pneg %p77
      $region18: #{net_forward.4} parent=11 // pred_check_branch
        %123 = sbr.rel (%p121) target = $region20
      $region19: #{net_forward.4} parent=11 // pred_region
        _
      $region20: #{net_forward.4} parent=11 // pred_fallthru
        _
    $region12: #{net_forward.4} parent=5 // pred_fallthru
      _
    %p124 = scmp.lt.s32.totalorder %s9, 4
    // Predicated region
    $region21: #{net_forward.4} parent=5 // pred_check
      %p125 = pneg %p124
    $region22: #{net_forward.4} parent=5 // pred_check_branch
      %127 = sbr.rel (%p125) target = $region24
    $region23: #{net_forward.4} parent=5 // pred_region
      // Predicated region
      $region25: #{net_forward.4} parent=23 // pred_check
        %p128 = pneg %p29
      $region26: #{net_forward.4} parent=23 // pred_check_branch
        %130 = sbr.rel (%p128) target = $region28
      $region27: #{net_forward.4} parent=23 // pred_region
        %s131 = smul.u32 2, %s9
        %p132 = scmp.lt.s32.totalorder %s131, 7
        %s133 = scalar_select %p132, %s131, 7
        %s134 = smul.addr %s133, 4
        %s135 = scalar_lea.vmem %s0, %s134
        %s136 = smul.u32 2, %s9
      $region28: #{net_forward.4} parent=23 // pred_fallthru
        _
    $region24: #{net_forward.4} parent=5 // pred_fallthru
      _
    %p137 = scmp.le.s32.totalorder 1, %s9
    %p138 = scmp.lt.s32.totalorder %s9, 5
    %p139 = pnand %p137, %p138
    %p140 = pneg %p139
    // Predicated region
    $region29: #{net_forward.4} parent=5 // pred_check
      _
    $region30: #{net_forward.4} parent=5 // pred_check_branch
      %142 = sbr.rel (%p139) target = $region32
    $region31: #{net_forward.4} parent=5 // pred_region
      %s143 = ssub.s32 %s9, 1
      %s144 = smul.u32 2, %s14
      %p145 = scmp.lt.s32.totalorder %s144, 7
      %s146 = scalar_select %p145, %s144, 7
      %s147 = smul.addr %s146, 4
      %s148 = scalar_lea.vmem %s0, %s147
      %p149 = pneg %p35
      %p150 = pneg %p32
      %p151 = pneg %p56
      %p152 = pneg %p53
      %p153 = pneg %p77
      %p154 = pneg %p74
      %p155 = pneg %p103
      %p156 = pneg %p100
      %s157 = smul.u32 2, %s14
      %p158 = scmp.lt.s32.totalorder %s157, 7
      %s159 = scalar_select %p158, %s157, 7
      %s160 = smul.addr %s159, 2
      %s161 = smul.addr %s160, 4
      %s162 = scalar_lea.vmem %s3, %s161
      %s163 = smul.u32 2, %s14
      %p164 = scmp.lt.s32.totalorder %s163, 7
      %s165 = scalar_select %p164, %s163, 7
      %s166 = smul.addr %s165, 4
      %s167 = scalar_lea.vmem %s0, %s166
      %s168 = smul.u32 2, %s14
      %s169 = smul.u32 2, %s14
      %p170 = scmp.lt.s32.totalorder %s169, 7
      %s171 = scalar_select %p170, %s169, 7
      %s172 = smul.addr %s171, 2
      %s173 = smul.addr %s172, 4
      %s174 = scalar_lea.vmem %s3, %s173
      %s175 = smul.u32 2, %s14
      %v177 = vld [vmem:[%s167] sm:$0xf]
      %v178 = vld [vmem:[%s167 + $0x4] sm:$0xf]
      %v179 = vld [vmem:[%s1] sm:$0xff]
      %v180 = vld [vmem:[%s1 + $0x8] sm:$0xff]
      %v181 = vld [vmem:[%s1 + $0x10] sm:$0xff]
      %v182 = vld [vmem:[%s1 + $0x18] sm:$0xff]
      %v183 = vld [vmem:[%s1 + $0x20] sm:$0xff]
      %v184 = vld [vmem:[%s1 + $0x28] sm:$0xff]
      %v185 = vld [vmem:[%s1 + $0x30] sm:$0xff]
      %v186 = vld [vmem:[%s1 + $0x38] sm:$0xff]
      %v187 = vld [vmem:[%s1 + $0x40] sm:$0xff]
      %v188 = vld [vmem:[%s1 + $0x48] sm:$0xff]
      %v189 = vld [vmem:[%s1 + $0x50] sm:$0x33]
      %v192 = vunpack.c.l.b16 %v177
      %v193 = vunpack.c.l.b16 %v178
      %v194 = vpack.c.b16 %v193, %v192
      %v206 = vunpack.c.l.b16 %v179
      %v207 = vunpack.c.h.b16 %v179
      %v208 = vunpack.c.l.b16 %v180
      %v209 = vunpack.c.h.b16 %v180
      %v210 = vunpack.c.l.b16 %v181
      %v211 = vunpack.c.h.b16 %v181
      %v212 = vunpack.c.l.b16 %v182
      %v213 = vunpack.c.h.b16 %v182
      %v214 = vunpack.c.l.b16 %v183
      %v215 = vunpack.c.h.b16 %v183
      %v216 = vunpack.c.l.b16 %v184
      %v217 = vunpack.c.h.b16 %v184
      %v218 = vunpack.c.l.b16 %v185
      %v219 = vunpack.c.h.b16 %v185
      %v220 = vunpack.c.l.b16 %v186
      %v221 = vunpack.c.h.b16 %v186
      %v222 = vunpack.c.l.b16 %v187
      %v223 = vunpack.c.h.b16 %v187
      %v224 = vunpack.c.l.b16 %v188
      %v225 = vunpack.c.h.b16 %v188
      %v226 = vunpack.c.l.b16 %v189
      %v227 = vunpack.c.h.b16 %v189
      %v228 = vpack.c.b16 %v208, %v206
      %v229 = vpack.c.b16 %v209, %v207
      %v230 = vpack.c.b16 %v212, %v210
      %v231 = vpack.c.b16 %v213, %v211
      %v232 = vpack.c.b16 %v216, %v214
      %v233 = vpack.c.b16 %v217, %v215
      %v234 = vpack.c.b16 %v220, %v218
      %v235 = vpack.c.b16 %v221, %v219
      %v236 = vpack.c.b16 %v224, %v222
      %v237 = vpack.c.b16 %v225, %v223
      %v238 = vpack.c.b16 %v226, %v226
      %v239 = vpack.c.b16 %v227, %v227
      %vm250 = vcmask 687104
      %v252 = vsel %vm250, %v194, 0
      %vm254 = vcmask 1041408
      %v256 = vsel %vm254, %v238, 0
      %v259 = vsel %vm254, %v239, 0
      %261 = vmatprep.subr.bf16.mxu0 %v229
      %262 = vmatpush1.bf16.msra.mxu0 %v228
      %263 = vmatprep.subr.bf16.mxu0 %v231
      %264 = vmatpush1.bf16.msra.mxu0 %v230
      %265 = vmatprep.subr.bf16.mxu0 %v233
      %266 = vmatpush1.bf16.msra.mxu0 %v232
      %267 = vmatprep.subr.bf16.mxu0 %v235
      %268 = vmatpush1.bf16.msra.mxu0 %v234
      %269 = vmatprep.subr.bf16.mxu0 %v237
      %270 = vmatpush1.bf16.msra.mxu0 %v236
      %271 = vmatprep.subr.bf16.mxu0 %v259
      %272 = vmatpush1.bf16.msra.mxu0 %v256
      %273 = vmatprep.subr.bf16.mxu0 0
      %274 = vmatpush1.bf16.msra.mxu0 0
      %275 = vmatprep.subr.bf16.mxu0 0
      %276 = vmatpush1.bf16.msra.mxu0 0
      %277 = vmatprep.subr.bf16.mxu0 0
      %278 = vmatpush1.bf16.msra.mxu0 0
      %279 = vmatprep.subr.bf16.mxu0 0
      %280 = vmatpush1.bf16.msra.mxu0 0
      %281 = vmatprep.subr.bf16.mxu0 0
      %282 = vmatpush1.bf16.msra.mxu0 0
      %283 = vmatprep.subr.bf16.mxu0 0
      %284 = vmatpush1.bf16.msra.mxu0 0
      %285 = vmatprep.subr.bf16.mxu0 0
      %286 = vmatpush1.bf16.msra.mxu0 0
      %287 = vmatprep.subr.bf16.mxu0 0
      %288 = vmatpush1.bf16.msra.mxu0 0
      %289 = vmatprep.subr.bf16.mxu0 0
      %290 = vmatpush1.bf16.msra.mxu0 0
      %291 = vmatprep.subr.bf16.mxu0 0
      %292 = vmatpush1.bf16.msra.mxu0 0
      %293 = vmatprep.mubr.bf16.mxu0 0
      %294 = vmatmul.mubr.bf16.gmra.mrb[0].mxu0 %v252
      %v295 = vpop.f32.mrb[0].mxu0
      %v296 = vadd.f32 0.0, %v295
      %v297 = vpop.f32.mrb[0].mxu0
      %v298 = vadd.f32 0.0, %v297
      %v299 = vpop.f32.mrb[0].mxu0
      %v300 = vadd.f32 0.0, %v299
      %v301 = vpop.f32.mrb[0].mxu0
      %v302 = vadd.f32 0.0, %v301
      %303 = vdwg.mxu0
      %304 = vst [vmem:[#allocation2] sm:$0xff] %v296
      %vm305 = vcmask 261120
      %306 = vst.msk [vmem:[#allocation2 + $0x8] sm:$0xff] %vm305, %v298
      %307 = vst [vmem:[#allocation2 + $0x10] sm:$0xff] %v300
      %308 = vst.msk [vmem:[#allocation2 + $0x18] sm:$0xff] %vm305, %v302
      %s309 = scalar_lea.vmem %s1, 88
      %v310 = vld [vmem:[%s309] sm:$0xff]
      %v311 = vld [vmem:[%s309 + $0x8] sm:$0xff]
      %v312 = vld [vmem:[%s309 + $0x10] sm:$0xff]
      %v313 = vld [vmem:[%s309 + $0x18] sm:$0xff]
      %v314 = vld [vmem:[%s309 + $0x20] sm:$0xff]
      %v315 = vld [vmem:[%s309 + $0x28] sm:$0xff]
      %v316 = vld [vmem:[%s309 + $0x30] sm:$0xff]
      %v317 = vld [vmem:[%s309 + $0x38] sm:$0xff]
      %v318 = vld [vmem:[%s309 + $0x40] sm:$0xff]
      %v319 = vld [vmem:[%s309 + $0x48] sm:$0xff]
      %v320 = vld [vmem:[%s309 + $0x50] sm:$0x33]
      %v332 = vunpack.c.l.b16 %v310
      %v333 = vunpack.c.h.b16 %v310
      %v334 = vunpack.c.l.b16 %v311
      %v335 = vunpack.c.h.b16 %v311
      %v336 = vunpack.c.l.b16 %v312
      %v337 = vunpack.c.h.b16 %v312
      %v338 = vunpack.c.l.b16 %v313
      %v339 = vunpack.c.h.b16 %v313
      %v340 = vunpack.c.l.b16 %v314
      %v341 = vunpack.c.h.b16 %v314
      %v342 = vunpack.c.l.b16 %v315
      %v343 = vunpack.c.h.b16 %v315
      %v344 = vunpack.c.l.b16 %v316
      %v345 = vunpack.c.h.b16 %v316
      %v346 = vunpack.c.l.b16 %v317
      %v347 = vunpack.c.h.b16 %v317
      %v348 = vunpack.c.l.b16 %v318
      %v349 = vunpack.c.h.b16 %v318
      %v350 = vunpack.c.l.b16 %v319
      %v351 = vunpack.c.h.b16 %v319
      %v352 = vunpack.c.l.b16 %v320
      %v353 = vunpack.c.h.b16 %v320
      %v354 = vpack.c.b16 %v334, %v332
      %v355 = vpack.c.b16 %v335, %v333
      %v356 = vpack.c.b16 %v338, %v336
      %v357 = vpack.c.b16 %v339, %v337
      %v358 = vpack.c.b16 %v342, %v340
      %v359 = vpack.c.b16 %v343, %v341
      %v360 = vpack.c.b16 %v346, %v344
      %v361 = vpack.c.b16 %v347, %v345
      %v362 = vpack.c.b16 %v350, %v348
      %v363 = vpack.c.b16 %v351, %v349
      %v364 = vpack.c.b16 %v352, %v352
      %v365 = vpack.c.b16 %v353, %v353
      %v377 = vsel %vm254, %v364, 0
      %v380 = vsel %vm254, %v365, 0
      %382 = vmatprep.subr.bf16.mxu0 %v355
      %383 = vmatpush1.bf16.msra.mxu0 %v354
      %384 = vmatprep.subr.bf16.mxu0 %v357
      %385 = vmatpush1.bf16.msra.mxu0 %v356
      %386 = vmatprep.subr.bf16.mxu0 %v359
      %387 = vmatpush1.bf16.msra.mxu0 %v358
      %388 = vmatprep.subr.bf16.mxu0 %v361
      %389 = vmatpush1.bf16.msra.mxu0 %v360
      %390 = vmatprep.subr.bf16.mxu0 %v363
      %391 = vmatpush1.bf16.msra.mxu0 %v362
      %392 = vmatprep.subr.bf16.mxu0 %v380
      %393 = vmatpush1.bf16.msra.mxu0 %v377
      %394 = vmatprep.subr.bf16.mxu0 0
      %395 = vmatpush1.bf16.msra.mxu0 0
      %396 = vmatprep.subr.bf16.mxu0 0
      %397 = vmatpush1.bf16.msra.mxu0 0
      %398 = vmatprep.subr.bf16.mxu0 0
      %399 = vmatpush1.bf16.msra.mxu0 0
      %400 = vmatprep.subr.bf16.mxu0 0
      %401 = vmatpush1.bf16.msra.mxu0 0
      %402 = vmatprep.subr.bf16.mxu0 0
      %403 = vmatpush1.bf16.msra.mxu0 0
      %404 = vmatprep.subr.bf16.mxu0 0
      %405 = vmatpush1.bf16.msra.mxu0 0
      %406 = vmatprep.subr.bf16.mxu0 0
      %407 = vmatpush1.bf16.msra.mxu0 0
      %408 = vmatprep.subr.bf16.mxu0 0
      %409 = vmatpush1.bf16.msra.mxu0 0
      %410 = vmatprep.subr.bf16.mxu0 0
      %411 = vmatpush1.bf16.msra.mxu0 0
      %412 = vmatprep.subr.bf16.mxu0 0
      %413 = vmatpush1.bf16.msra.mxu0 0
      %414 = vmatprep.mubr.bf16.mxu0 0
      %415 = vmatmul.mubr.bf16.gmra.mrb[0].mxu0 %v252
      %v416 = vpop.f32.mrb[0].mxu0
      %v417 = vadd.f32 0.0, %v416
      %v418 = vpop.f32.mrb[0].mxu0
      %v419 = vadd.f32 0.0, %v418
      %v420 = vpop.f32.mrb[0].mxu0
      %v421 = vadd.f32 0.0, %v420
      %v422 = vpop.f32.mrb[0].mxu0
      %v423 = vadd.f32 0.0, %v422
      %424 = vdwg.mxu0
      %v425 = vld [vmem:[#allocation2] sm:$0xff]
      %v426 = vld [vmem:[#allocation2 + $0x8] sm:$0xff]
      %v427 = vld [vmem:[#allocation2 + $0x10] sm:$0xff]
      %v428 = vld [vmem:[#allocation2 + $0x18] sm:$0xff]
      %v429 = vrot.slane %v417, 1
      %v430 = vrot.slane %v419, 1
      %v431 = vrot.slane %v421, 1
      %v432 = vrot.slane %v423, 1
      %v433 = vlaneseq
      %v434 = vshrl.u32 %v433, 7
      %vm435 = vcmp.lt.s32.totalorder %v434, 7
      %v436 = vsel %vm435, %v429, %v431
      %v437 = vsel %vm435, %v430, %v432
      %v438 = vsel %vm435, %v431, %v429
      %v439 = vsel %vm435, %v432, %v430
      %v440 = vadd.f32 %v425, %v436
      %v441 = vadd.f32 %v426, %v437
      %v442 = vadd.f32 %v427, %v438
      %v443 = vadd.f32 %v428, %v439
      %444 = vst [vmem:[#allocation2] sm:$0xff] %v440
      %445 = vst.msk [vmem:[#allocation2 + $0x8] sm:$0xff] %vm305, %v441
      %446 = vst [vmem:[#allocation2 + $0x10] sm:$0xff] %v442
      %447 = vst.msk [vmem:[#allocation2 + $0x18] sm:$0xff] %vm305, %v443
      %s448 = scalar_lea.vmem %s1, 176
      %v449 = vld [vmem:[%s448] sm:$0xff]
      %v450 = vld [vmem:[%s448 + $0x8] sm:$0xff]
      %v451 = vld [vmem:[%s448 + $0x10] sm:$0xff]
      %v452 = vld [vmem:[%s448 + $0x18] sm:$0xff]
      %v453 = vld [vmem:[%s448 + $0x20] sm:$0xff]
      %v454 = vld [vmem:[%s448 + $0x28] sm:$0xff]
      %v455 = vld [vmem:[%s448 + $0x30] sm:$0xff]
      %v456 = vld [vmem:[%s448 + $0x38] sm:$0xff]
      %v457 = vld [vmem:[%s448 + $0x40] sm:$0xff]
      %v458 = vld [vmem:[%s448 + $0x48] sm:$0xff]
      %v459 = vld [vmem:[%s448 + $0x50] sm:$0x33]
      %v471 = vunpack.c.l.b16 %v449
      %v472 = vunpack.c.h.b16 %v449
      %v473 = vunpack.c.l.b16 %v450
      %v474 = vunpack.c.h.b16 %v450
      %v475 = vunpack.c.l.b16 %v451
      %v476 = vunpack.c.h.b16 %v451
      %v477 = vunpack.c.l.b16 %v452
      %v478 = vunpack.c.h.b16 %v452
      %v479 = vunpack.c.l.b16 %v453
      %v480 = vunpack.c.h.b16 %v453
      %v481 = vunpack.c.l.b16 %v454
      %v482 = vunpack.c.h.b16 %v454
      %v483 = vunpack.c.l.b16 %v455
      %v484 = vunpack.c.h.b16 %v455
      %v485 = vunpack.c.l.b16 %v456
      %v486 = vunpack.c.h.b16 %v456
      %v487 = vunpack.c.l.b16 %v457
      %v488 = vunpack.c.h.b16 %v457
      %v489 = vunpack.c.l.b16 %v458
      %v490 = vunpack.c.h.b16 %v458
      %v491 = vunpack.c.l.b16 %v459
      %v492 = vunpack.c.h.b16 %v459
      %v493 = vpack.c.b16 %v473, %v471
      %v494 = vpack.c.b16 %v474, %v472
      %v495 = vpack.c.b16 %v477, %v475
      %v496 = vpack.c.b16 %v478, %v476
      %v497 = vpack.c.b16 %v481, %v479
      %v498 = vpack.c.b16 %v482, %v480
      %v499 = vpack.c.b16 %v485, %v483
      %v500 = vpack.c.b16 %v486, %v484
      %v501 = vpack.c.b16 %v489, %v487
      %v502 = vpack.c.b16 %v490, %v488
      %v503 = vpack.c.b16 %v491, %v491
      %v504 = vpack.c.b16 %v492, %v492
      %v516 = vsel %vm254, %v503, 0
      %v519 = vsel %vm254, %v504, 0
      %521 = vmatprep.subr.bf16.mxu0 %v494
      %522 = vmatpush1.bf16.msra.mxu0 %v493
      %523 = vmatprep.subr.bf16.mxu0 %v496
      %524 = vmatpush1.bf16.msra.mxu0 %v495
      %525 = vmatprep.subr.bf16.mxu0 %v498
      %526 = vmatpush1.bf16.msra.mxu0 %v497
      %527 = vmatprep.subr.bf16.mxu0 %v500
      %528 = vmatpush1.bf16.msra.mxu0 %v499
      %529 = vmatprep.subr.bf16.mxu0 %v502
      %530 = vmatpush1.bf16.msra.mxu0 %v501
      %531 = vmatprep.subr.bf16.mxu0 %v519
      %532 = vmatpush1.bf16.msra.mxu0 %v516
      %533 = vmatprep.subr.bf16.mxu0 0
      %534 = vmatpush1.bf16.msra.mxu0 0
      %535 = vmatprep.subr.bf16.mxu0 0
      %536 = vmatpush1.bf16.msra.mxu0 0
      %537 = vmatprep.subr.bf16.mxu0 0
      %538 = vmatpush1.bf16.msra.mxu0 0
      %539 = vmatprep.subr.bf16.mxu0 0
      %540 = vmatpush1.bf16.msra.mxu0 0
      %541 = vmatprep.subr.bf16.mxu0 0
      %542 = vmatpush1.bf16.msra.mxu0 0
      %543 = vmatprep.subr.bf16.mxu0 0
      %544 = vmatpush1.bf16.msra.mxu0 0
      %545 = vmatprep.subr.bf16.mxu0 0
      %546 = vmatpush1.bf16.msra.mxu0 0
      %547 = vmatprep.subr.bf16.mxu0 0
      %548 = vmatpush1.bf16.msra.mxu0 0
      %549 = vmatprep.subr.bf16.mxu0 0
      %550 = vmatpush1.bf16.msra.mxu0 0
      %551 = vmatprep.subr.bf16.mxu0 0
      %552 = vmatpush1.bf16.msra.mxu0 0
      %553 = vmatprep.mubr.bf16.mxu0 0
      %554 = vmatmul.mubr.bf16.gmra.mrb[0].mxu0 %v252
      %v555 = vpop.f32.mrb[0].mxu0
      %v556 = vadd.f32 0.0, %v555
      %v557 = vpop.f32.mrb[0].mxu0
      %v558 = vadd.f32 0.0, %v557
      %v559 = vpop.f32.mrb[0].mxu0
      %v560 = vadd.f32 0.0, %v559
      %v561 = vpop.f32.mrb[0].mxu0
      %v562 = vadd.f32 0.0, %v561
      %563 = vdwg.mxu0
      %v564 = vld [vmem:[#allocation2] sm:$0xff]
      %v565 = vld [vmem:[#allocation2 + $0x8] sm:$0xff]
      %v566 = vld [vmem:[#allocation2 + $0x10] sm:$0xff]
      %v567 = vld [vmem:[#allocation2 + $0x18] sm:$0xff]
      %v568 = vrot.slane %v556, 2
      %v569 = vrot.slane %v558, 2
      %v570 = vrot.slane %v560, 2
      %v571 = vrot.slane %v562, 2
      %vm572 = vcmp.lt.s32.totalorder %v434, 6
      %v573 = vsel %vm572, %v568, %v570
      %v574 = vsel %vm572, %v569, %v571
      %v575 = vsel %vm572, %v570, %v568
      %v576 = vsel %vm572, %v571, %v569
      %v577 = vadd.f32 %v564, %v573
      %v578 = vadd.f32 %v565, %v574
      %v579 = vadd.f32 %v566, %v575
      %v580 = vadd.f32 %v567, %v576
      %581 = vst [vmem:[#allocation2] sm:$0xff] %v577
      %582 = vst.msk [vmem:[#allocation2 + $0x8] sm:$0xff] %vm305, %v578
      %583 = vst [vmem:[#allocation2 + $0x10] sm:$0xff] %v579
      %584 = vst.msk [vmem:[#allocation2 + $0x18] sm:$0xff] %vm305, %v580
      %s585 = scalar_lea.vmem %s1, 264
      %v586 = vld [vmem:[%s585] sm:$0xff]
      %v587 = vld [vmem:[%s585 + $0x8] sm:$0xff]
      %v588 = vld [vmem:[%s585 + $0x10] sm:$0xff]
      %v589 = vld [vmem:[%s585 + $0x18] sm:$0xff]
      %v590 = vld [vmem:[%s585 + $0x20] sm:$0xff]
      %v591 = vld [vmem:[%s585 + $0x28] sm:$0xff]
      %v592 = vld [vmem:[%s585 + $0x30] sm:$0xff]
      %v593 = vld [vmem:[%s585 + $0x38] sm:$0xff]
      %v594 = vld [vmem:[%s585 + $0x40] sm:$0xff]
      %v595 = vld [vmem:[%s585 + $0x48] sm:$0xff]
      %v596 = vld [vmem:[%s585 + $0x50] sm:$0x33]
      %v608 = vunpack.c.l.b16 %v586
      %v609 = vunpack.c.h.b16 %v586
      %v610 = vunpack.c.l.b16 %v587
      %v611 = vunpack.c.h.b16 %v587
      %v612 = vunpack.c.l.b16 %v588
      %v613 = vunpack.c.h.b16 %v588
      %v614 = vunpack.c.l.b16 %v589
      %v615 = vunpack.c.h.b16 %v589
      %v616 = vunpack.c.l.b16 %v590
      %v617 = vunpack.c.h.b16 %v590
      %v618 = vunpack.c.l.b16 %v591
      %v619 = vunpack.c.h.b16 %v591
      %v620 = vunpack.c.l.b16 %v592
      %v621 = vunpack.c.h.b16 %v592
      %v622 = vunpack.c.l.b16 %v593
      %v623 = vunpack.c.h.b16 %v593
      %v624 = vunpack.c.l.b16 %v594
      %v625 = vunpack.c.h.b16 %v594
      %v626 = vunpack.c.l.b16 %v595
      %v627 = vunpack.c.h.b16 %v595
      %v628 = vunpack.c.l.b16 %v596
      %v629 = vunpack.c.h.b16 %v596
      %v630 = vpack.c.b16 %v610, %v608
      %v631 = vpack.c.b16 %v611, %v609
      %v632 = vpack.c.b16 %v614, %v612
      %v633 = vpack.c.b16 %v615, %v613
      %v634 = vpack.c.b16 %v618, %v616
      %v635 = vpack.c.b16 %v619, %v617
      %v636 = vpack.c.b16 %v622, %v620
      %v637 = vpack.c.b16 %v623, %v621
      %v638 = vpack.c.b16 %v626, %v624
      %v639 = vpack.c.b16 %v627, %v625
      %v640 = vpack.c.b16 %v628, %v628
      %v641 = vpack.c.b16 %v629, %v629
      %v653 = vsel %vm254, %v640, 0
      %v656 = vsel %vm254, %v641, 0
      %658 = vmatprep.subr.bf16.mxu0 %v631
      %659 = vmatpush1.bf16.msra.mxu0 %v630
      %660 = vmatprep.subr.bf16.mxu0 %v633
      %661 = vmatpush1.bf16.msra.mxu0 %v632
      %662 = vmatprep.subr.bf16.mxu0 %v635
      %663 = vmatpush1.bf16.msra.mxu0 %v634
      %664 = vmatprep.subr.bf16.mxu0 %v637
      %665 = vmatpush1.bf16.msra.mxu0 %v636
      %666 = vmatprep.subr.bf16.mxu0 %v639
      %667 = vmatpush1.bf16.msra.mxu0 %v638
      %668 = vmatprep.subr.bf16.mxu0 %v656
      %669 = vmatpush1.bf16.msra.mxu0 %v653
      %670 = vmatprep.subr.bf16.mxu0 0
      %671 = vmatpush1.bf16.msra.mxu0 0
      %672 = vmatprep.subr.bf16.mxu0 0
      %673 = vmatpush1.bf16.msra.mxu0 0
      %674 = vmatprep.subr.bf16.mxu0 0
      %675 = vmatpush1.bf16.msra.mxu0 0
      %676 = vmatprep.subr.bf16.mxu0 0
      %677 = vmatpush1.bf16.msra.mxu0 0
      %678 = vmatprep.subr.bf16.mxu0 0
      %679 = vmatpush1.bf16.msra.mxu0 0
      %680 = vmatprep.subr.bf16.mxu0 0
      %681 = vmatpush1.bf16.msra.mxu0 0
      %682 = vmatprep.subr.bf16.mxu0 0
      %683 = vmatpush1.bf16.msra.mxu0 0
      %684 = vmatprep.subr.bf16.mxu0 0
      %685 = vmatpush1.bf16.msra.mxu0 0
      %686 = vmatprep.subr.bf16.mxu0 0
      %687 = vmatpush1.bf16.msra.mxu0 0
      %688 = vmatprep.subr.bf16.mxu0 0
      %689 = vmatpush1.bf16.msra.mxu0 0
      %690 = vmatprep.mubr.bf16.mxu0 0
      %691 = vmatmul.mubr.bf16.gmra.mrb[0].mxu0 %v252
      %v692 = vpop.f32.mrb[0].mxu0
      %v693 = vadd.f32 0.0, %v692
      %v694 = vpop.f32.mrb[0].mxu0
      %v695 = vadd.f32 0.0, %v694
      %v696 = vpop.f32.mrb[0].mxu0
      %v697 = vadd.f32 0.0, %v696
      %v698 = vpop.f32.mrb[0].mxu0
      %v699 = vadd.f32 0.0, %v698
      %700 = vdwg.mxu0
      %v701 = vld [vmem:[#allocation2] sm:$0xff]
      %v702 = vld [vmem:[#allocation2 + $0x8] sm:$0xff]
      %v703 = vld [vmem:[#allocation2 + $0x10] sm:$0xff]
      %v704 = vld [vmem:[#allocation2 + $0x18] sm:$0xff]
      %v705 = vrot.slane %v693, 3
      %v706 = vrot.slane %v695, 3
      %v707 = vrot.slane %v697, 3
      %v708 = vrot.slane %v699, 3
      %vm709 = vcmp.lt.s32.totalorder %v434, 5
      %v710 = vsel %vm709, %v705, %v707
      %v711 = vsel %vm709, %v706, %v708
      %v712 = vsel %vm709, %v707, %v705
      %v713 = vsel %vm709, %v708, %v706
      %v714 = vadd.f32 %v701, %v710
      %v715 = vadd.f32 %v702, %v711
      %v716 = vadd.f32 %v703, %v712
      %v717 = vadd.f32 %v704, %v713
      %718 = vst [vmem:[#allocation2] sm:$0xff] %v714
      %719 = vst.msk [vmem:[#allocation2 + $0x8] sm:$0xff] %vm305, %v715
      %720 = vst [vmem:[#allocation2 + $0x10] sm:$0xff] %v716
      %721 = vst.msk [vmem:[#allocation2 + $0x18] sm:$0xff] %vm305, %v717
      %s722 = scalar_lea.vmem %s1, 352
      %v723 = vld [vmem:[%s722] sm:$0xff]
      %v724 = vld [vmem:[%s722 + $0x8] sm:$0xff]
      %v725 = vld [vmem:[%s722 + $0x10] sm:$0xff]
      %v726 = vld [vmem:[%s722 + $0x18] sm:$0xff]
      %v727 = vld [vmem:[%s722 + $0x20] sm:$0xff]
      %v728 = vld [vmem:[%s722 + $0x28] sm:$0xff]
      %v729 = vld [vmem:[%s722 + $0x30] sm:$0xff]
      %v730 = vld [vmem:[%s722 + $0x38] sm:$0xff]
      %v731 = vld [vmem:[%s722 + $0x40] sm:$0xff]
      %v732 = vld [vmem:[%s722 + $0x48] sm:$0xff]
      %v733 = vld [vmem:[%s722 + $0x50] sm:$0x33]
      %v745 = vunpack.c.l.b16 %v723
      %v746 = vunpack.c.h.b16 %v723
      %v747 = vunpack.c.l.b16 %v724
      %v748 = vunpack.c.h.b16 %v724
      %v749 = vunpack.c.l.b16 %v725
      %v750 = vunpack.c.h.b16 %v725
      %v751 = vunpack.c.l.b16 %v726
      %v752 = vunpack.c.h.b16 %v726
      %v753 = vunpack.c.l.b16 %v727
      %v754 = vunpack.c.h.b16 %v727
      %v755 = vunpack.c.l.b16 %v728
      %v756 = vunpack.c.h.b16 %v728
      %v757 = vunpack.c.l.b16 %v729
      %v758 = vunpack.c.h.b16 %v729
      %v759 = vunpack.c.l.b16 %v730
      %v760 = vunpack.c.h.b16 %v730
      %v761 = vunpack.c.l.b16 %v731
      %v762 = vunpack.c.h.b16 %v731
      %v763 = vunpack.c.l.b16 %v732
      %v764 = vunpack.c.h.b16 %v732
      %v765 = vunpack.c.l.b16 %v733
      %v766 = vunpack.c.h.b16 %v733
      %v767 = vpack.c.b16 %v747, %v745
      %v768 = vpack.c.b16 %v748, %v746
      %v769 = vpack.c.b16 %v751, %v749
      %v770 = vpack.c.b16 %v752, %v750
      %v771 = vpack.c.b16 %v755, %v753
      %v772 = vpack.c.b16 %v756, %v754
      %v773 = vpack.c.b16 %v759, %v757
      %v774 = vpack.c.b16 %v760, %v758
      %v775 = vpack.c.b16 %v763, %v761
      %v776 = vpack.c.b16 %v764, %v762
      %v777 = vpack.c.b16 %v765, %v765
      %v778 = vpack.c.b16 %v766, %v766
      %v790 = vsel %vm254, %v777, 0
      %v793 = vsel %vm254, %v778, 0
      %795 = vmatprep.subr.bf16.mxu0 %v768
      %796 = vmatpush1.bf16.msra.mxu0 %v767
      %797 = vmatprep.subr.bf16.mxu0 %v770
      %798 = vmatpush1.bf16.msra.mxu0 %v769
      %799 = vmatprep.subr.bf16.mxu0 %v772
      %800 = vmatpush1.bf16.msra.mxu0 %v771
      %801 = vmatprep.subr.bf16.mxu0 %v774
      %802 = vmatpush1.bf16.msra.mxu0 %v773
      %803 = vmatprep.subr.bf16.mxu0 %v776
      %804 = vmatpush1.bf16.msra.mxu0 %v775
      %805 = vmatprep.subr.bf16.mxu0 %v793
      %806 = vmatpush1.bf16.msra.mxu0 %v790
      %807 = vmatprep.subr.bf16.mxu0 0
      %808 = vmatpush1.bf16.msra.mxu0 0
      %809 = vmatprep.subr.bf16.mxu0 0
      %810 = vmatpush1.bf16.msra.mxu0 0
      %811 = vmatprep.subr.bf16.mxu0 0
      %812 = vmatpush1.bf16.msra.mxu0 0
      %813 = vmatprep.subr.bf16.mxu0 0
      %814 = vmatpush1.bf16.msra.mxu0 0
      %815 = vmatprep.subr.bf16.mxu0 0
      %816 = vmatpush1.bf16.msra.mxu0 0
      %817 = vmatprep.subr.bf16.mxu0 0
      %818 = vmatpush1.bf16.msra.mxu0 0
      %819 = vmatprep.subr.bf16.mxu0 0
      %820 = vmatpush1.bf16.msra.mxu0 0
      %821 = vmatprep.subr.bf16.mxu0 0
      %822 = vmatpush1.bf16.msra.mxu0 0
      %823 = vmatprep.subr.bf16.mxu0 0
      %824 = vmatpush1.bf16.msra.mxu0 0
      %825 = vmatprep.subr.bf16.mxu0 0
      %826 = vmatpush1.bf16.msra.mxu0 0
      %827 = vmatprep.mubr.bf16.mxu0 0
      %828 = vmatmul.mubr.bf16.gmra.mrb[0].mxu0 %v252
      %v829 = vpop.f32.mrb[0].mxu0
      %v830 = vadd.f32 0.0, %v829
      %v831 = vpop.f32.mrb[0].mxu0
      %v832 = vadd.f32 0.0, %v831
      %v833 = vpop.f32.mrb[0].mxu0
      %v834 = vadd.f32 0.0, %v833
      %v835 = vpop.f32.mrb[0].mxu0
      %v836 = vadd.f32 0.0, %v835
      %837 = vdwg.mxu0
      %v838 = vld [vmem:[#allocation2] sm:$0xff]
      %v839 = vld [vmem:[#allocation2 + $0x8] sm:$0xff]
      %v840 = vld [vmem:[#allocation2 + $0x10] sm:$0xff]
      %v841 = vld [vmem:[#allocation2 + $0x18] sm:$0xff]
      %v842 = vrot.slane %v830, 4
      %v843 = vrot.slane %v832, 4
      %v844 = vrot.slane %v834, 4
      %v845 = vrot.slane %v836, 4
      %vm846 = vcmp.lt.s32.totalorder %v434, 4
      %v847 = vsel %vm846, %v842, %v844
      %v848 = vsel %vm846, %v843, %v845
      %v849 = vsel %vm846, %v844, %v842
      %v850 = vsel %vm846, %v845, %v843
      %v851 = vadd.f32 %v838, %v847
      %v852 = vadd.f32 %v839, %v848
      %v853 = vadd.f32 %v840, %v849
      %v854 = vadd.f32 %v841, %v850
      %855 = vst [vmem:[#allocation2] sm:$0xff] %v851
      %856 = vst.msk [vmem:[#allocation2 + $0x8] sm:$0xff] %vm305, %v852
      %857 = vst [vmem:[#allocation2 + $0x10] sm:$0xff] %v853
      %858 = vst.msk [vmem:[#allocation2 + $0x18] sm:$0xff] %vm305, %v854
      %v859 = vld [vmem:[#allocation2] sm:$0xff]
      %v860 = vld [vmem:[#allocation2 + $0x8] sm:$0xff]
      %v861 = vld [vmem:[#allocation2 + $0x10] sm:$0xff]
      %v862 = vld [vmem:[#allocation2 + $0x18] sm:$0xff]
      %v863 = vld [vmem:[%s2] sm:$0x3]
      %v865 = vlaneseq
      %v866 = vshrl.u32 %v865, 7
      %v867 = vsub.s32 0, %v866
      %v868 = vrot.slane %v863, %v867
      %v869 = vlaneseq
      %v870 = vshrl.u32 %v869, 7
      %v871 = vsub.s32 1, %v870
      %v872 = vrot.slane %v863, %v871
      %v875 = vadd.f32 %v859, %v868
      %v876 = vadd.f32 %v860, %v872
      %v877 = vadd.f32 %v861, %v868
      %v878 = vadd.f32 %v862, %v872
      %v879 = vmax.f32 %v875, 0.0
      %v880 = vmax.f32 %v876, 0.0
      %v881 = vmax.f32 %v877, 0.0
      %v882 = vmax.f32 %v878, 0.0
      %v883 = vpack.c.bf16 %v881, %v879
      %v884 = vpack.c.bf16 %v882, %v880
      %v887 = vunpack.c.l.b16 %v883
      %v888 = vunpack.c.l.b16 %v884
      %v889 = vunpack.c.h.b16 %v883
      %v890 = vunpack.c.h.b16 %v884
      %v891 = vpack.c.b16 %v888, %v887
      %v892 = vpack.c.b16 %v890, %v889
      %vm895 = vcmask 1043456
      %vm896 = vcmask 261124
      %vm897 = vmor %vm896, %vm895
      %898 = vst.msk [vmem:[%s174] sm:$0xff] %vm897, %v891
      %899 = vst.msk [vmem:[%s174 + $0x8] sm:$0xff] %vm897, %v892
      %s900 = smul.u32 2, %s14
      %p901 = scmp.lt.s32.totalorder %s900, 7
      %s902 = scalar_select %p901, %s900, 7
      %s903 = smul.addr %s902, 2
      %s904 = smul.addr %s903, 4
      %s905 = scalar_lea.vmem %s3, %s904
      // Predicated region
      $region33: #{net_forward.4} parent=31 // pred_check
        %p906 = pneg %p100
      $region34: #{net_forward.4} parent=31 // pred_check_branch
        %908 = sbr.rel (%p906) target = $region36
      $region35: #{net_forward.4} parent=31 // pred_region
        %s909 = smul.u32 2, %s14
      $region36: #{net_forward.4} parent=31 // pred_fallthru
        _
    $region32: #{net_forward.4} parent=5 // pred_fallthru
      _
    %p910 = scmp.le.s32.totalorder 2, %s9
    // Predicated region
    $region37: #{net_forward.4} parent=5 // pred_check
      %p911 = pneg %p910
    $region38: #{net_forward.4} parent=5 // pred_check_branch
      %913 = sbr.rel (%p911) target = $region40
    $region39: #{net_forward.4} parent=5 // pred_region
      %s914 = ssub.s32 %s9, 2
      // Predicated region
      $region41: #{net_forward.4} parent=39 // pred_check
        %p915 = pneg %p106
      $region42: #{net_forward.4} parent=39 // pred_check_branch
        %917 = sbr.rel (%p915) target = $region44
      $region43: #{net_forward.4} parent=39 // pred_region
        %s918 = smul.u32 2, %s15
        %p919 = scmp.lt.s32.totalorder %s918, 7
        %s920 = scalar_select %p919, %s918, 7
        %s921 = smul.addr %s920, 2
        %s922 = smul.addr %s921, 4
        %s923 = scalar_lea.vmem %s3, %s922
      $region44: #{net_forward.4} parent=39 // pred_fallthru
        _
    $region40: #{net_forward.4} parent=5 // pred_fallthru
      _
  $region6: #{net_forward.4} parent=0 // loop_footer
    %s13 = sadd.s32 1, %s9
  $region7: #{net_forward.4} parent=0 // loop_footer_branch
    %8 = sbr.rel target = $region3
  $region8: #{net_forward.4} parent=0 // loop_exit
    _

// kernel: net_forward.5
$region0: #{net_forward.5}
  #allocation0 [shape = 'u32[]', space=smem, size = 0x4, offset = 0x4, fixed_abs, tag = 'smem constant byte address 0x4 - core index']
  #allocation1 [shape = 'u32[144,128]{1,0:T(1,128)}', space=vmem, size = 0x12000, scoped, tag = 'internal scratch']
  %s0 = inlined_call_operand.vmem [shape: bf16[16,400], index: 0, kind: input, shape index: {}]
  %s1 = inlined_call_operand.vmem [shape: bf16[400,128], index: 1, kind: input, shape index: {}]
  %s2 = inlined_call_operand.vmem [shape: f32[1,128], index: 2, kind: input, shape index: {}]
  %s3 = inlined_call_operand.vmem [shape: bf16[128,128], index: 3, kind: input, shape index: {}]
  %s4 = inlined_call_operand.vmem [shape: f32[1,128], index: 4, kind: input, shape index: {}]
  %s5 = inlined_call_operand.vmem [shape: bf16[128,128], index: 5, kind: input, shape index: {}]
  %s6 = inlined_call_operand.vmem [shape: f32[1,128], index: 6, kind: input, shape index: {}]
  %s7 = inlined_call_operand.vmem [shape: f32[16,128], index: 7, kind: output, shape index: {}]
  %s8 = sld [smem:[#allocation0]]
  $region61: #{net_forward.5} parent=0
    _
  %s10 = ssub.s32 1, %s8
  %s11 = scalar_select 0, %s10, %s8
  loop: start=0, step=1, limit=4
  $region2: #{net_forward.5} parent=0 // loop_pre_header
    _
  $region3: #{net_forward.5} parent=0 // loop_header
    %s13 = sphi 0, %s17
    %p14 = scmp.ge.s32.totalorder %s13, 4
    %s23 = sphi 0, %s25
    %s26 = sphi 0, %s23
    %s27 = sphi 0, %s26
    %s43 = sphi 0, %s27
    %s47 = sphi 0, %s47
    %s49 = sphi 0, %s47
    %s50 = sphi 0, %s49
    %s64 = sphi 0, %s50
    %s68 = sphi 0, %s68
    %s70 = sphi 0, %s68
    %s71 = sphi 0, %s70
    %s85 = sphi 0, %s71
    %s89 = sphi 0, %s89
    %s91 = sphi 0, %s89
    %s92 = sphi 0, %s91
    %s106 = sphi 0, %s92
    %s110 = sphi 0, %s110
    %s112 = sphi 0, %s110
    %s113 = sphi 0, %s112
    %s127 = sphi 0, %s113
    %s131 = sphi 0, %s131
    %s133 = sphi 0, %s131
    %s134 = sphi 0, %s133
    %s148 = sphi 0, %s134
    %s152 = sphi 0, %s152
    %s154 = sphi 0, %s152
    %s155 = sphi 0, %s154
    %s169 = sphi 0, %s155
    %s175 = sphi 0, %s177
    %s178 = sphi 0, %s175
    %s179 = sphi 0, %s178
    %s195 = sphi 0, %s179
  $region4: #{net_forward.5} parent=0 // loop_header_branch
    %16 = sbr.rel (%p14) target = $region8
  $region5: #{net_forward.5} parent=0 // loop_body
    %s18 = ssub.s32 %s13, 1
    %s19 = ssub.s32 %s13, 2
    %s20 = sadd.s32 %s13, 1
    %s21 = ssub.s32 %s13, %s20
    %p22 = scmp.eq.s32.totalorder %s21, 0
    %s24 = sadd.s32 %s23, 1
    %s25 = scalar_select %p22, %s23, %s24
    %p28 = pneg %p22
    %p29 = scmp.eq.s32.totalorder %s13, 1
    %p30 = por %p28, %p29
    %p31 = scmp.ne.s32.totalorder %s23, %s26
    %p32 = scmp.eq.s32.totalorder %s13, 0
    %p33 = por %p31, %p32
    %p34 = scmp.ne.s32.totalorder %s23, %s26
    %p35 = scmp.eq.s32.totalorder %s18, 1
    %p36 = por %p34, %p35
    %p37 = scmp.ne.s32.totalorder %s26, %s27
    %p38 = scmp.eq.s32.totalorder %s18, 0
    %p39 = por %p37, %p38
    %p40 = scmp.ne.s32.totalorder %s26, %s27
    %p41 = scmp.eq.s32.totalorder %s19, 1
    %p42 = por %p40, %p41
    %p44 = scmp.ne.s32.totalorder %s27, %s43
    %p45 = scmp.eq.s32.totalorder %s19, 0
    %p46 = por %p44, %p45
    %s48 = sadd.s32 %s47, 1
    %p51 = scmp.eq.s32.totalorder %s13, 1
    %p52 = scmp.ne.s32.totalorder %s47, %s49
    %p53 = scmp.eq.s32.totalorder %s13, 0
    %p54 = por %p52, %p53
    %p55 = scmp.ne.s32.totalorder %s47, %s49
    %p56 = scmp.eq.s32.totalorder %s18, 1
    %p57 = por %p55, %p56
    %p58 = scmp.ne.s32.totalorder %s49, %s50
    %p59 = scmp.eq.s32.totalorder %s18, 0
    %p60 = por %p58, %p59
    %p61 = scmp.ne.s32.totalorder %s49, %s50
    %p62 = scmp.eq.s32.totalorder %s19, 1
    %p63 = por %p61, %p62
    %p65 = scmp.ne.s32.totalorder %s50, %s64
    %p66 = scmp.eq.s32.totalorder %s19, 0
    %p67 = por %p65, %p66
    %s69 = sadd.s32 %s68, 1
    %p72 = scmp.eq.s32.totalorder %s13, 1
    %p73 = scmp.ne.s32.totalorder %s68, %s70
    %p74 = scmp.eq.s32.totalorder %s13, 0
    %p75 = por %p73, %p74
    %p76 = scmp.ne.s32.totalorder %s68, %s70
    %p77 = scmp.eq.s32.totalorder %s18, 1
    %p78 = por %p76, %p77
    %p79 = scmp.ne.s32.totalorder %s70, %s71
    %p80 = scmp.eq.s32.totalorder %s18, 0
    %p81 = por %p79, %p80
    %p82 = scmp.ne.s32.totalorder %s70, %s71
    %p83 = scmp.eq.s32.totalorder %s19, 1
    %p84 = por %p82, %p83
    %p86 = scmp.ne.s32.totalorder %s71, %s85
    %p87 = scmp.eq.s32.totalorder %s19, 0
    %p88 = por %p86, %p87
    %s90 = sadd.s32 %s89, 1
    %p93 = scmp.eq.s32.totalorder %s13, 1
    %p94 = scmp.ne.s32.totalorder %s89, %s91
    %p95 = scmp.eq.s32.totalorder %s13, 0
    %p96 = por %p94, %p95
    %p97 = scmp.ne.s32.totalorder %s89, %s91
    %p98 = scmp.eq.s32.totalorder %s18, 1
    %p99 = por %p97, %p98
    %p100 = scmp.ne.s32.totalorder %s91, %s92
    %p101 = scmp.eq.s32.totalorder %s18, 0
    %p102 = por %p100, %p101
    %p103 = scmp.ne.s32.totalorder %s91, %s92
    %p104 = scmp.eq.s32.totalorder %s19, 1
    %p105 = por %p103, %p104
    %p107 = scmp.ne.s32.totalorder %s92, %s106
    %p108 = scmp.eq.s32.totalorder %s19, 0
    %p109 = por %p107, %p108
    %s111 = sadd.s32 %s110, 1
    %p114 = scmp.eq.s32.totalorder %s13, 1
    %p115 = scmp.ne.s32.totalorder %s110, %s112
    %p116 = scmp.eq.s32.totalorder %s13, 0
    %p117 = por %p115, %p116
    %p118 = scmp.ne.s32.totalorder %s110, %s112
    %p119 = scmp.eq.s32.totalorder %s18, 1
    %p120 = por %p118, %p119
    %p121 = scmp.ne.s32.totalorder %s112, %s113
    %p122 = scmp.eq.s32.totalorder %s18, 0
    %p123 = por %p121, %p122
    %p124 = scmp.ne.s32.totalorder %s112, %s113
    %p125 = scmp.eq.s32.totalorder %s19, 1
    %p126 = por %p124, %p125
    %p128 = scmp.ne.s32.totalorder %s113, %s127
    %p129 = scmp.eq.s32.totalorder %s19, 0
    %p130 = por %p128, %p129
    %s132 = sadd.s32 %s131, 1
    %p135 = scmp.eq.s32.totalorder %s13, 1
    %p136 = scmp.ne.s32.totalorder %s131, %s133
    %p137 = scmp.eq.s32.totalorder %s13, 0
    %p138 = por %p136, %p137
    %p139 = scmp.ne.s32.totalorder %s131, %s133
    %p140 = scmp.eq.s32.totalorder %s18, 1
    %p141 = por %p139, %p140
    %p142 = scmp.ne.s32.totalorder %s133, %s134
    %p143 = scmp.eq.s32.totalorder %s18, 0
    %p144 = por %p142, %p143
    %p145 = scmp.ne.s32.totalorder %s133, %s134
    %p146 = scmp.eq.s32.totalorder %s19, 1
    %p147 = por %p145, %p146
    %p149 = scmp.ne.s32.totalorder %s134, %s148
    %p150 = scmp.eq.s32.totalorder %s19, 0
    %p151 = por %p149, %p150
    %s153 = sadd.s32 %s152, 1
    %p156 = scmp.eq.s32.totalorder %s13, 1
    %p157 = scmp.ne.s32.totalorder %s152, %s154
    %p158 = scmp.eq.s32.totalorder %s13, 0
    %p159 = por %p157, %p158
    %p160 = scmp.ne.s32.totalorder %s152, %s154
    %p161 = scmp.eq.s32.totalorder %s18, 1
    %p162 = por %p160, %p161
    %p163 = scmp.ne.s32.totalorder %s154, %s155
    %p164 = scmp.eq.s32.totalorder %s18, 0
    %p165 = por %p163, %p164
    %p166 = scmp.ne.s32.totalorder %s154, %s155
    %p167 = scmp.eq.s32.totalorder %s19, 1
    %p168 = por %p166, %p167
    %p170 = scmp.ne.s32.totalorder %s155, %s169
    %p171 = scmp.eq.s32.totalorder %s19, 0
    %p172 = por %p170, %p171
    %s173 = ssub.s32 %s13, %s20
    %p174 = scmp.eq.s32.totalorder %s173, 0
    %s176 = sadd.s32 %s175, 1
    %s177 = scalar_select %p174, %s175, %s176
    %p180 = pneg %p174
    %p181 = scmp.eq.s32.totalorder %s13, 1
    %p182 = por %p180, %p181
    %p183 = scmp.ne.s32.totalorder %s175, %s178
    %p184 = scmp.eq.s32.totalorder %s13, 0
    %p185 = por %p183, %p184
    %p186 = scmp.ne.s32.totalorder %s175, %s178
    %p187 = scmp.eq.s32.totalorder %s18, 1
    %p188 = por %p186, %p187
    %p189 = scmp.ne.s32.totalorder %s178, %s179
    %p190 = scmp.eq.s32.totalorder %s18, 0
    %p191 = por %p189, %p190
    %p192 = scmp.ne.s32.totalorder %s178, %s179
    %p193 = scmp.eq.s32.totalorder %s19, 1
    %p194 = por %p192, %p193
    %p196 = scmp.ne.s32.totalorder %s179, %s195
    %p197 = scmp.eq.s32.totalorder %s19, 0
    %p198 = por %p196, %p197
    %p199 = scmp.le.s32.totalorder 1, %s13
    %p200 = scmp.lt.s32.totalorder %s13, 3
    %p201 = pnand %p199, %p200
    %p202 = pneg %p201
    // Predicated region
    $region9: #{net_forward.5} parent=5 // pred_check
      _
    $region10: #{net_forward.5} parent=5 // pred_check_branch
      %204 = sbr.rel (%p201) target = $region12
    $region11: #{net_forward.5} parent=5 // pred_region
      %s205 = ssub.s32 %s13, 1
      // Predicated region
      $region13: #{net_forward.5} parent=11 // pred_check
        %p206 = pneg %p60
      $region14: #{net_forward.5} parent=11 // pred_check_branch
        %208 = sbr.rel (%p206) target = $region16
      $region15: #{net_forward.5} parent=11 // pred_region
        _
      $region16: #{net_forward.5} parent=11 // pred_fallthru
        _
      // Predicated region
      $region17: #{net_forward.5} parent=11 // pred_check
        %p209 = pneg %p81
      $region18: #{net_forward.5} parent=11 // pred_check_branch
        %211 = sbr.rel (%p209) target = $region20
      $region19: #{net_forward.5} parent=11 // pred_region
        _
      $region20: #{net_forward.5} parent=11 // pred_fallthru
        _
      // Predicated region
      $region21: #{net_forward.5} parent=11 // pred_check
        %p212 = pneg %p102
      $region22: #{net_forward.5} parent=11 // pred_check_branch
        %214 = sbr.rel (%p212) target = $region24
      $region23: #{net_forward.5} parent=11 // pred_region
        _
      $region24: #{net_forward.5} parent=11 // pred_fallthru
        _
      // Predicated region
      $region25: #{net_forward.5} parent=11 // pred_check
        %p215 = pneg %p123
      $region26: #{net_forward.5} parent=11 // pred_check_branch
        %217 = sbr.rel (%p215) target = $region28
      $region27: #{net_forward.5} parent=11 // pred_region
        _
      $region28: #{net_forward.5} parent=11 // pred_fallthru
        _
      // Predicated region
      $region29: #{net_forward.5} parent=11 // pred_check
        %p218 = pneg %p144
      $region30: #{net_forward.5} parent=11 // pred_check_branch
        %220 = sbr.rel (%p218) target = $region32
      $region31: #{net_forward.5} parent=11 // pred_region
        _
      $region32: #{net_forward.5} parent=11 // pred_fallthru
        _
      // Predicated region
      $region33: #{net_forward.5} parent=11 // pred_check
        %p221 = pneg %p165
      $region34: #{net_forward.5} parent=11 // pred_check_branch
        %223 = sbr.rel (%p221) target = $region36
      $region35: #{net_forward.5} parent=11 // pred_region
        _
      $region36: #{net_forward.5} parent=11 // pred_fallthru
        _
    $region12: #{net_forward.5} parent=5 // pred_fallthru
      _
    %p224 = scmp.lt.s32.totalorder %s13, 2
    // Predicated region
    $region37: #{net_forward.5} parent=5 // pred_check
      %p225 = pneg %p224
    $region38: #{net_forward.5} parent=5 // pred_check_branch
      %227 = sbr.rel (%p225) target = $region40
    $region39: #{net_forward.5} parent=5 // pred_region
      // Predicated region
      $region41: #{net_forward.5} parent=39 // pred_check
        %p228 = pneg %p33
      $region42: #{net_forward.5} parent=39 // pred_check_branch
        %230 = sbr.rel (%p228) target = $region44
      $region43: #{net_forward.5} parent=39 // pred_region
        %p231 = scmp.lt.s32.totalorder %s13, 1
        %s232 = scalar_select %p231, %s13, 1
        %s233 = smul.addr %s232, 4
        %s234 = smul.addr %s233, 4
        %s235 = scalar_lea.vmem %s0, %s234
      $region44: #{net_forward.5} parent=39 // pred_fallthru
        _
    $region40: #{net_forward.5} parent=5 // pred_fallthru
      _
    %p236 = scmp.le.s32.totalorder 1, %s13
    %p237 = scmp.lt.s32.totalorder %s13, 3
    %p238 = pnand %p236, %p237
    %p239 = pneg %p238
    // Predicated region
    $region45: #{net_forward.5} parent=5 // pred_check
      _
    $region46: #{net_forward.5} parent=5 // pred_check_branch
      %241 = sbr.rel (%p238) target = $region48
    $region47: #{net_forward.5} parent=5 // pred_region
      %s242 = ssub.s32 %s13, 1
      %p243 = scmp.lt.s32.totalorder %s18, 1
      %s244 = scalar_select %p243, %s18, 1
      %s245 = smul.addr %s244, 4
      %s246 = smul.addr %s245, 4
      %s247 = scalar_lea.vmem %s0, %s246
      %p248 = pneg %p39
      %p249 = pneg %p36
      %p250 = pneg %p60
      %p251 = pneg %p57
      %p252 = pneg %p81
      %p253 = pneg %p78
      %p254 = pneg %p102
      %p255 = pneg %p99
      %p256 = pneg %p123
      %p257 = pneg %p120
      %p258 = pneg %p144
      %p259 = pneg %p141
      %p260 = pneg %p165
      %p261 = pneg %p162
      %p262 = pneg %p191
      %p263 = pneg %p188
      %p264 = scmp.lt.s32.totalorder %s18, 1
      %s265 = scalar_select %p264, %s18, 1
      %s266 = smul.addr %s265, 8
      %s267 = scalar_lea.vmem %s7, %s266
      %p268 = scmp.lt.s32.totalorder %s18, 1
      %s269 = scalar_select %p268, %s18, 1
      %s270 = smul.addr %s269, 4
      %s271 = smul.addr %s270, 4
      %s272 = scalar_lea.vmem %s0, %s271
      %p273 = scmp.lt.s32.totalorder %s18, 1
      %s274 = scalar_select %p273, %s18, 1
      %s275 = smul.addr %s274, 8
      %s276 = scalar_lea.vmem %s7, %s275
      %v278 = vld [vmem:[%s272] sm:$0xff]
      %v279 = vld [vmem:[%s272 + $0x8] sm:$0xff]
      %v280 = vld [vmem:[%s1] sm:$0xf]
      %v281 = vld [vmem:[%s1 + $0x4] sm:$0xf]
      %v282 = vld [vmem:[%s1 + $0x8] sm:$0xf]
      %v283 = vld [vmem:[%s1 + $0xc] sm:$0xf]
      %v284 = vld [vmem:[%s1 + $0x10] sm:$0xf]
      %v285 = vld [vmem:[%s1 + $0x14] sm:$0xf]
      %v286 = vld [vmem:[%s1 + $0x18] sm:$0xf]
      %v287 = vld [vmem:[%s1 + $0x1c] sm:$0xf]
      %v288 = vld [vmem:[%s1 + $0x20] sm:$0xf]
      %v289 = vld [vmem:[%s1 + $0x24] sm:$0xf]
      %v290 = vld [vmem:[%s1 + $0x28] sm:$0xf]
      %v291 = vld [vmem:[%s1 + $0x2c] sm:$0xf]
      %v292 = vld [vmem:[%s1 + $0x30] sm:$0xf]
      %v293 = vld [vmem:[%s1 + $0x34] sm:$0xf]
      %v294 = vld [vmem:[%s1 + $0x38] sm:$0xf]
      %v295 = vld [vmem:[%s1 + $0x3c] sm:$0xf]
      %v296 = vld [vmem:[%s1 + $0x40] sm:$0xf]
      %v297 = vld [vmem:[%s1 + $0x44] sm:$0xf]
      %v298 = vld [vmem:[%s1 + $0x48] sm:$0xf]
      %v299 = vld [vmem:[%s1 + $0x4c] sm:$0xf]
      %v300 = vld [vmem:[%s1 + $0x50] sm:$0xf]
      %v301 = vld [vmem:[%s1 + $0x54] sm:$0xf]
      %v302 = vld [vmem:[%s1 + $0x58] sm:$0xf]
      %v303 = vld [vmem:[%s1 + $0x5c] sm:$0xf]
      %v304 = vld [vmem:[%s1 + $0x60] sm:$0xf]
      %v305 = vld [vmem:[%s1 + $0x64] sm:$0xf]
      %v306 = vld [vmem:[%s1 + $0x68] sm:$0xf]
      %v307 = vld [vmem:[%s1 + $0x6c] sm:$0xf]
      %v308 = vld [vmem:[%s1 + $0x70] sm:$0xf]
      %v309 = vld [vmem:[%s1 + $0x74] sm:$0xf]
      %v310 = vld [vmem:[%s1 + $0x78] sm:$0xf]
      %v311 = vld [vmem:[%s1 + $0x7c] sm:$0xf]
      %v312 = vld [vmem:[%s1 + $0x80] sm:$0xf]
      %v313 = vld [vmem:[%s1 + $0x84] sm:$0xf]
      %v314 = vld [vmem:[%s1 + $0x88] sm:$0xf]
      %v315 = vld [vmem:[%s1 + $0x8c] sm:$0xf]
      %v316 = vld [vmem:[%s1 + $0x90] sm:$0xf]
      %v317 = vld [vmem:[%s1 + $0x94] sm:$0xf]
      %v318 = vld [vmem:[%s1 + $0x98] sm:$0xf]
      %v319 = vld [vmem:[%s1 + $0x9c] sm:$0xf]
      %v320 = vld [vmem:[%s1 + $0xa0] sm:$0xf]
      %v321 = vld [vmem:[%s1 + $0xa4] sm:$0xf]
      %v322 = vld [vmem:[%s1 + $0xa8] sm:$0xf]
      %v323 = vld [vmem:[%s1 + $0xac] sm:$0xf]
      %v324 = vld [vmem:[%s1 + $0xb0] sm:$0xf]
      %v325 = vld [vmem:[%s1 + $0xb4] sm:$0xf]
      %v326 = vld [vmem:[%s1 + $0xb8] sm:$0xf]
      %v327 = vld [vmem:[%s1 + $0xbc] sm:$0xf]
      %v328 = vld [vmem:[%s1 + $0xc0] sm:$0xf]
      %v329 = vld [vmem:[%s1 + $0xc4] sm:$0xf]
      %v330 = vld [vmem:[%s2] sm:$0x1]
      %v332 = vlaneseq
      %v333 = vshrl.u32 %v332, 7
      %v334 = vsub.s32 0, %v333
      %v335 = vrot.slane %v330, %v334
      %v339 = vunpack.c.l.b16 %v278
      %v340 = vunpack.c.h.b16 %v278
      %v341 = vunpack.c.l.b16 %v279
      %v342 = vunpack.c.h.b16 %v279
      %v343 = vpack.c.b16 %v339, %v339
      %v344 = vpack.c.b16 %v340, %v340
      %v345 = vpack.c.b16 %v341, %v341
      %v346 = vpack.c.b16 %v342, %v342
      %v400 = vunpack.c.l.b16 %v280
      %v401 = vunpack.c.l.b16 %v281
      %v402 = vunpack.c.l.b16 %v282
      %v403 = vunpack.c.l.b16 %v283
      %v404 = vunpack.c.l.b16 %v284
      %v405 = vunpack.c.l.b16 %v285
      %v406 = vunpack.c.l.b16 %v286
      %v407 = vunpack.c.l.b16 %v287
      %v408 = vunpack.c.l.b16 %v288
      %v409 = vunpack.c.l.b16 %v289
      %v410 = vunpack.c.l.b16 %v290
      %v411 = vunpack.c.l.b16 %v291
      %v412 = vunpack.c.l.b16 %v292
      %v413 = vunpack.c.l.b16 %v293
      %v414 = vunpack.c.l.b16 %v294
      %v415 = vunpack.c.l.b16 %v295
      %v416 = vunpack.c.l.b16 %v296
      %v417 = vunpack.c.l.b16 %v297
      %v418 = vunpack.c.l.b16 %v298
      %v419 = vunpack.c.l.b16 %v299
      %v420 = vunpack.c.l.b16 %v300
      %v421 = vunpack.c.l.b16 %v301
      %v422 = vunpack.c.l.b16 %v302
      %v423 = vunpack.c.l.b16 %v303
      %v424 = vunpack.c.l.b16 %v304
      %v425 = vunpack.c.l.b16 %v305
      %v426 = vunpack.c.l.b16 %v306
      %v427 = vunpack.c.l.b16 %v307
      %v428 = vunpack.c.l.b16 %v308
      %v429 = vunpack.c.l.b16 %v309
      %v430 = vunpack.c.l.b16 %v310
      %v431 = vunpack.c.l.b16 %v311
      %v432 = vunpack.c.l.b16 %v312
      %v433 = vunpack.c.l.b16 %v313
      %v434 = vunpack.c.l.b16 %v314
      %v435 = vunpack.c.l.b16 %v315
      %v436 = vunpack.c.l.b16 %v316
      %v437 = vunpack.c.l.b16 %v317
      %v438 = vunpack.c.l.b16 %v318
      %v439 = vunpack.c.l.b16 %v319
      %v440 = vunpack.c.l.b16 %v320
      %v441 = vunpack.c.l.b16 %v321
      %v442 = vunpack.c.l.b16 %v322
      %v443 = vunpack.c.l.b16 %v323
      %v444 = vunpack.c.l.b16 %v324
      %v445 = vunpack.c.l.b16 %v325
      %v446 = vunpack.c.l.b16 %v326
      %v447 = vunpack.c.l.b16 %v327
      %v448 = vunpack.c.l.b16 %v328
      %v449 = vunpack.c.l.b16 %v329
      %v450 = vpack.c.b16 %v401, %v400
      %v451 = vpack.c.b16 %v403, %v402
      %v452 = vpack.c.b16 %v405, %v404
      %v453 = vpack.c.b16 %v407, %v406
      %v454 = vpack.c.b16 %v409, %v408
      %v455 = vpack.c.b16 %v411, %v410
      %v456 = vpack.c.b16 %v413, %v412
      %v457 = vpack.c.b16 %v415, %v414
      %v458 = vpack.c.b16 %v417, %v416
      %v459 = vpack.c.b16 %v419, %v418
      %v460 = vpack.c.b16 %v421, %v420
      %v461 = vpack.c.b16 %v423, %v422
      %v462 = vpack.c.b16 %v425, %v424
      %v463 = vpack.c.b16 %v427, %v426
      %v464 = vpack.c.b16 %v429, %v428
      %v465 = vpack.c.b16 %v431, %v430
      %v466 = vpack.c.b16 %v433, %v432
      %v467 = vpack.c.b16 %v435, %v434
      %v468 = vpack.c.b16 %v437, %v436
      %v469 = vpack.c.b16 %v439, %v438
      %v470 = vpack.c.b16 %v441, %v440
      %v471 = vpack.c.b16 %v443, %v442
      %v472 = vpack.c.b16 %v445, %v444
      %v473 = vpack.c.b16 %v447, %v446
      %v474 = vpack.c.b16 %v449, %v448
      %vm500 = vcmask 130048
      %v502 = vsel %vm500, %v346, 0
      %504 = vmatprep.subr.bf16.mxu0 0
      %505 = vmatpush1.bf16.msra.mxu0 %v450
      %506 = vmatprep.subr.bf16.mxu0 0
      %507 = vmatpush1.bf16.msra.mxu0 %v451
      %508 = vmatprep.subr.bf16.mxu0 0
      %509 = vmatpush1.bf16.msra.mxu0 %v452
      %510 = vmatprep.subr.bf16.mxu0 0
      %511 = vmatpush1.bf16.msra.mxu0 %v453
      %512 = vmatprep.subr.bf16.mxu0 0
      %513 = vmatpush1.bf16.msra.mxu0 %v454
      %514 = vmatprep.subr.bf16.mxu0 0
      %515 = vmatpush1.bf16.msra.mxu0 %v455
      %516 = vmatprep.subr.bf16.mxu0 0
      %517 = vmatpush1.bf16.msra.mxu0 %v456
      %518 = vmatprep.subr.bf16.mxu0 0
      %519 = vmatpush1.bf16.msra.mxu0 %v457
      %520 = vmatprep.subr.bf16.mxu0 0
      %521 = vmatpush1.bf16.msra.mxu0 %v458
      %522 = vmatprep.subr.bf16.mxu0 0
      %523 = vmatpush1.bf16.msra.mxu0 %v459
      %524 = vmatprep.subr.bf16.mxu0 0
      %525 = vmatpush1.bf16.msra.mxu0 %v460
      %526 = vmatprep.subr.bf16.mxu0 0
      %527 = vmatpush1.bf16.msra.mxu0 %v461
      %528 = vmatprep.subr.bf16.mxu0 0
      %529 = vmatpush1.bf16.msra.mxu0 %v462
      %530 = vmatprep.subr.bf16.mxu0 0
      %531 = vmatpush1.bf16.msra.mxu0 %v463
      %532 = vmatprep.subr.bf16.mxu0 0
      %533 = vmatpush1.bf16.msra.mxu0 %v464
      %534 = vmatprep.subr.bf16.mxu0 0
      %535 = vmatpush1.bf16.msra.mxu0 %v465
      %536 = vmatprep.mubr.bf16.mxu0 %v344
      %537 = vmatmul.mubr.bf16.gmra.mrb[0].mxu0 %v343
      %v538 = vpop.f32.mrb[0].mxu0
      %v539 = vadd.f32 %v335, %v538
      %v540 = vpop.f32.mrb[0].mxu0
      %v541 = vpop.f32.mrb[0].mxu0
      %v542 = vpop.f32.mrb[0].mxu0
      %543 = vdwg.mxu0
      %544 = vmatprep.subr.bf16.mxu0 0
      %545 = vmatpush1.bf16.msra.mxu0 %v466
      %546 = vmatprep.subr.bf16.mxu0 0
      %547 = vmatpush1.bf16.msra.mxu0 %v467
      %548 = vmatprep.subr.bf16.mxu0 0
      %549 = vmatpush1.bf16.msra.mxu0 %v468
      %550 = vmatprep.subr.bf16.mxu0 0
      %551 = vmatpush1.bf16.msra.mxu0 %v469
      %552 = vmatprep.subr.bf16.mxu0 0
      %553 = vmatpush1.bf16.msra.mxu0 %v470
      %554 = vmatprep.subr.bf16.mxu0 0
      %555 = vmatpush1.bf16.msra.mxu0 %v471
      %556 = vmatprep.subr.bf16.mxu0 0
      %557 = vmatpush1.bf16.msra.mxu0 %v472
      %558 = vmatprep.subr.bf16.mxu0 0
      %559 = vmatpush1.bf16.msra.mxu0 %v473
      %560 = vmatprep.subr.bf16.mxu0 0
      %561 = vmatpush1.bf16.msra.mxu0 %v474
      %562 = vmatprep.subr.bf16.mxu0 0
      %563 = vmatpush1.bf16.msra.mxu0 0
      %564 = vmatprep.subr.bf16.mxu0 0
      %565 = vmatpush1.bf16.msra.mxu0 0
      %566 = vmatprep.subr.bf16.mxu0 0
      %567 = vmatpush1.bf16.msra.mxu0 0
      %568 = vmatprep.subr.bf16.mxu0 0
      %569 = vmatpush1.bf16.msra.mxu0 0
      %570 = vmatprep.subr.bf16.mxu0 0
      %571 = vmatpush1.bf16.msra.mxu0 0
      %572 = vmatprep.subr.bf16.mxu0 0
      %573 = vmatpush1.bf16.msra.mxu0 0
      %574 = vmatprep.subr.bf16.mxu0 0
      %575 = vmatpush1.bf16.msra.mxu0 0
      %576 = vmatprep.mubr.bf16.mxu0 %v502
      %577 = vmatmul.mubr.bf16.gmra.mrb[0].mxu0 %v345
      %v578 = vpop.f32.mrb[0].mxu0
      %v579 = vadd.f32 %v539, %v578
      %v580 = vpop.f32.mrb[0].mxu0
      %v581 = vpop.f32.mrb[0].mxu0
      %v582 = vpop.f32.mrb[0].mxu0
      %583 = vdwg.mxu0
      %v584 = vmax.f32 %v579, 0.0
      %v585 = vpack.c.bf16 %v584, %v584
      %v586 = vld [vmem:[%s3] sm:$0xf]
      %v587 = vld [vmem:[%s3 + $0x4] sm:$0xf]
      %v588 = vld [vmem:[%s3 + $0x8] sm:$0xf]
      %v589 = vld [vmem:[%s3 + $0xc] sm:$0xf]
      %v590 = vld [vmem:[%s3 + $0x10] sm:$0xf]
      %v591 = vld [vmem:[%s3 + $0x14] sm:$0xf]
      %v592 = vld [vmem:[%s3 + $0x18] sm:$0xf]
      %v593 = vld [vmem:[%s3 + $0x1c] sm:$0xf]
      %v594 = vld [vmem:[%s3 + $0x20] sm:$0xf]
      %v595 = vld [vmem:[%s3 + $0x24] sm:$0xf]
      %v596 = vld [vmem:[%s3 + $0x28] sm:$0xf]
      %v597 = vld [vmem:[%s3 + $0x2c] sm:$0xf]
      %v598 = vld [vmem:[%s3 + $0x30] sm:$0xf]
      %v599 = vld [vmem:[%s3 + $0x34] sm:$0xf]
      %v600 = vld [vmem:[%s3 + $0x38] sm:$0xf]
      %v601 = vld [vmem:[%s3 + $0x3c] sm:$0xf]
      %v602 = vld [vmem:[%s4] sm:$0x1]
      %v604 = vlaneseq
      %v605 = vshrl.u32 %v604, 7
      %v606 = vsub.s32 0, %v605
      %v607 = vrot.slane %v602, %v606
      %v625 = vunpack.c.l.b16 %v586
      %v626 = vunpack.c.l.b16 %v587
      %v627 = vunpack.c.l.b16 %v588
      %v628 = vunpack.c.l.b16 %v589
      %v629 = vunpack.c.l.b16 %v590
      %v630 = vunpack.c.l.b16 %v591
      %v631 = vunpack.c.l.b16 %v592
      %v632 = vunpack.c.l.b16 %v593
      %v633 = vunpack.c.l.b16 %v594
      %v634 = vunpack.c.l.b16 %v595
      %v635 = vunpack.c.l.b16 %v596
      %v636 = vunpack.c.l.b16 %v597
      %v637 = vunpack.c.l.b16 %v598
      %v638 = vunpack.c.l.b16 %v599
      %v639 = vunpack.c.l.b16 %v600
      %v640 = vunpack.c.l.b16 %v601
      %v641 = vpack.c.b16 %v626, %v625
      %v642 = vpack.c.b16 %v628, %v627
      %v643 = vpack.c.b16 %v630, %v629
      %v644 = vpack.c.b16 %v632, %v631
      %v645 = vpack.c.b16 %v634, %v633
      %v646 = vpack.c.b16 %v636, %v635
      %v647 = vpack.c.b16 %v638, %v637
      %v648 = vpack.c.b16 %v640, %v639
      %657 = vmatprep.subr.bf16.mxu0 0
      %658 = vmatpush1.bf16.msra.mxu0 %v641
      %659 = vmatprep.subr.bf16.mxu0 0
      %660 = vmatpush1.bf16.msra.mxu0 %v642
      %661 = vmatprep.subr.bf16.mxu0 0
      %662 = vmatpush1.bf16.msra.mxu0 %v643
      %663 = vmatprep.subr.bf16.mxu0 0
      %664 = vmatpush1.bf16.msra.mxu0 %v644
      %665 = vmatprep.subr.bf16.mxu0 0
      %666 = vmatpush1.bf16.msra.mxu0 %v645
      %667 = vmatprep.subr.bf16.mxu0 0
      %668 = vmatpush1.bf16.msra.mxu0 %v646
      %669 = vmatprep.subr.bf16.mxu0 0
      %670 = vmatpush1.bf16.msra.mxu0 %v647
      %671 = vmatprep.subr.bf16.mxu0 0
      %672 = vmatpush1.bf16.msra.mxu0 %v648
      %673 = vmatprep.subr.bf16.mxu0 0
      %674 = vmatpush1.bf16.msra.mxu0 0
      %675 = vmatprep.subr.bf16.mxu0 0
      %676 = vmatpush1.bf16.msra.mxu0 0
      %677 = vmatprep.subr.bf16.mxu0 0
      %678 = vmatpush1.bf16.msra.mxu0 0
      %679 = vmatprep.subr.bf16.mxu0 0
      %680 = vmatpush1.bf16.msra.mxu0 0
      %681 = vmatprep.subr.bf16.mxu0 0
      %682 = vmatpush1.bf16.msra.mxu0 0
      %683 = vmatprep.subr.bf16.mxu0 0
      %684 = vmatpush1.bf16.msra.mxu0 0
      %685 = vmatprep.subr.bf16.mxu0 0
      %686 = vmatpush1.bf16.msra.mxu0 0
      %687 = vmatprep.subr.bf16.mxu0 0
      %688 = vmatpush1.bf16.msra.mxu0 0
      %689 = vmatprep.mubr.bf16.mxu0 0
      %690 = vmatmul.mubr.bf16.gmra.mrb[0].mxu0 %v585
      %v691 = vpop.f32.mrb[0].mxu0
      %v692 = vadd.f32 %v607, %v691
      %v693 = vpop.f32.mrb[0].mxu0
      %v694 = vpop.f32.mrb[0].mxu0
      %v695 = vpop.f32.mrb[0].mxu0
      %696 = vdwg.mxu0
      %v697 = vmax.f32 %v692, 0.0
      %v698 = vpack.c.bf16 %v697, %v697
      %v699 = vld [vmem:[%s5] sm:$0xf]
      %v700 = vld [vmem:[%s5 + $0x4] sm:$0xf]
      %v701 = vld [vmem:[%s5 + $0x8] sm:$0xf]
      %v702 = vld [vmem:[%s5 + $0xc] sm:$0xf]
      %v703 = vld [vmem:[%s5 + $0x10] sm:$0xf]
      %v704 = vld [vmem:[%s5 + $0x14] sm:$0xf]
      %v705 = vld [vmem:[%s5 + $0x18] sm:$0xf]
      %v706 = vld [vmem:[%s5 + $0x1c] sm:$0xf]
      %v707 = vld [vmem:[%s5 + $0x20] sm:$0xf]
      %v708 = vld [vmem:[%s5 + $0x24] sm:$0xf]
      %v709 = vld [vmem:[%s5 + $0x28] sm:$0xf]
      %v710 = vld [vmem:[%s5 + $0x2c] sm:$0xf]
      %v711 = vld [vmem:[%s5 + $0x30] sm:$0xf]
      %v712 = vld [vmem:[%s5 + $0x34] sm:$0xf]
      %v713 = vld [vmem:[%s5 + $0x38] sm:$0xf]
      %v714 = vld [vmem:[%s5 + $0x3c] sm:$0xf]
      %v715 = vld [vmem:[%s6] sm:$0x1]
      %v717 = vlaneseq
      %v718 = vshrl.u32 %v717, 7
      %v719 = vsub.s32 0, %v718
      %v720 = vrot.slane %v715, %v719
      %v738 = vunpack.c.l.b16 %v699
      %v739 = vunpack.c.l.b16 %v700
      %v740 = vunpack.c.l.b16 %v701
      %v741 = vunpack.c.l.b16 %v702
      %v742 = vunpack.c.l.b16 %v703
      %v743 = vunpack.c.l.b16 %v704
      %v744 = vunpack.c.l.b16 %v705
      %v745 = vunpack.c.l.b16 %v706
      %v746 = vunpack.c.l.b16 %v707
      %v747 = vunpack.c.l.b16 %v708
      %v748 = vunpack.c.l.b16 %v709
      %v749 = vunpack.c.l.b16 %v710
      %v750 = vunpack.c.l.b16 %v711
      %v751 = vunpack.c.l.b16 %v712
      %v752 = vunpack.c.l.b16 %v713
      %v753 = vunpack.c.l.b16 %v714
      %v754 = vpack.c.b16 %v739, %v738
      %v755 = vpack.c.b16 %v741, %v740
      %v756 = vpack.c.b16 %v743, %v742
      %v757 = vpack.c.b16 %v745, %v744
      %v758 = vpack.c.b16 %v747, %v746
      %v759 = vpack.c.b16 %v749, %v748
      %v760 = vpack.c.b16 %v751, %v750
      %v761 = vpack.c.b16 %v753, %v752
      %770 = vmatprep.subr.bf16.mxu0 0
      %771 = vmatpush1.bf16.msra.mxu0 %v754
      %772 = vmatprep.subr.bf16.mxu0 0
      %773 = vmatpush1.bf16.msra.mxu0 %v755
      %774 = vmatprep.subr.bf16.mxu0 0
      %775 = vmatpush1.bf16.msra.mxu0 %v756
      %776 = vmatprep.subr.bf16.mxu0 0
      %777 = vmatpush1.bf16.msra.mxu0 %v757
      %778 = vmatprep.subr.bf16.mxu0 0
      %779 = vmatpush1.bf16.msra.mxu0 %v758
      %780 = vmatprep.subr.bf16.mxu0 0
      %781 = vmatpush1.bf16.msra.mxu0 %v759
      %782 = vmatprep.subr.bf16.mxu0 0
      %783 = vmatpush1.bf16.msra.mxu0 %v760
      %784 = vmatprep.subr.bf16.mxu0 0
      %785 = vmatpush1.bf16.msra.mxu0 %v761
      %786 = vmatprep.subr.bf16.mxu0 0
      %787 = vmatpush1.bf16.msra.mxu0 0
      %788 = vmatprep.subr.bf16.mxu0 0
      %789 = vmatpush1.bf16.msra.mxu0 0
      %790 = vmatprep.subr.bf16.mxu0 0
      %791 = vmatpush1.bf16.msra.mxu0 0
      %792 = vmatprep.subr.bf16.mxu0 0
      %793 = vmatpush1.bf16.msra.mxu0 0
      %794 = vmatprep.subr.bf16.mxu0 0
      %795 = vmatpush1.bf16.msra.mxu0 0
      %796 = vmatprep.subr.bf16.mxu0 0
      %797 = vmatpush1.bf16.msra.mxu0 0
      %798 = vmatprep.subr.bf16.mxu0 0
      %799 = vmatpush1.bf16.msra.mxu0 0
      %800 = vmatprep.subr.bf16.mxu0 0
      %801 = vmatpush1.bf16.msra.mxu0 0
      %802 = vmatprep.mubr.bf16.mxu0 0
      %803 = vmatmul.mubr.bf16.gmra.mrb[0].mxu0 %v698
      %v804 = vpop.f32.mrb[0].mxu0
      %v805 = vadd.f32 %v720, %v804
      %v806 = vpop.f32.mrb[0].mxu0
      %v807 = vpop.f32.mrb[0].mxu0
      %v808 = vpop.f32.mrb[0].mxu0
      %809 = vdwg.mxu0
      %810 = vst [vmem:[%s276] sm:$0xff] %v805
      %p811 = scmp.lt.s32.totalorder %s18, 1
      %s812 = scalar_select %p811, %s18, 1
      %s813 = smul.addr %s812, 8
      %s814 = scalar_lea.vmem %s7, %s813
      // Predicated region
      $region49: #{net_forward.5} parent=47 // pred_check
        %p815 = pneg %p188
      $region50: #{net_forward.5} parent=47 // pred_check_branch
        %817 = sbr.rel (%p815) target = $region52
      $region51: #{net_forward.5} parent=47 // pred_region
        _
      $region52: #{net_forward.5} parent=47 // pred_fallthru
        _
    $region48: #{net_forward.5} parent=5 // pred_fallthru
      _
    %p818 = scmp.le.s32.totalorder 2, %s13
    // Predicated region
    $region53: #{net_forward.5} parent=5 // pred_check
      %p819 = pneg %p818
    $region54: #{net_forward.5} parent=5 // pred_check_branch
      %821 = sbr.rel (%p819) target = $region56
    $region55: #{net_forward.5} parent=5 // pred_region
      %s822 = ssub.s32 %s13, 2
      // Predicated region
      $region57: #{net_forward.5} parent=55 // pred_check
        %p823 = pneg %p194
      $region58: #{net_forward.5} parent=55 // pred_check_branch
        %825 = sbr.rel (%p823) target = $region60
      $region59: #{net_forward.5} parent=55 // pred_region
        %p826 = scmp.lt.s32.totalorder %s19, 1
        %s827 = scalar_select %p826, %s19, 1
        %s828 = smul.addr %s827, 8
        %s829 = scalar_lea.vmem %s7, %s828
      $region60: #{net_forward.5} parent=55 // pred_fallthru
        _
    $region56: #{net_forward.5} parent=5 // pred_fallthru
      _
  $region6: #{net_forward.5} parent=0 // loop_footer
    %s17 = sadd.s32 1, %s13
  $region7: #{net_forward.5} parent=0 // loop_footer_branch
    %12 = sbr.rel target = $region3
  $region8: #{net_forward.5} parent=0 // loop_exit
    _

</llo_original>
